<compile_context>
chip_gen: v5e
topology: v5e:2x2
jax: 0.10.0
libtpu: 0.0.40
codegen_flags: <defaults>
</compile_context>

<pallas_src>
import math

import jax
import jax.numpy as jnp
from jax import lax
from jax.experimental import pallas as pl
from jax.experimental.pallas import tpu as pltpu

_EPS = 1e-5
_INV_SQRT2 = 0.7071067811865476


def _round_up(x, m):
    return ((x + m - 1) // m) * m


# ---------------------------------------------------------------------------
# Fused kernel: conv1(3x3,s1) + GN(1) + GELU + conv2(3x3,s2, wide) + GN(1).
# One grid step processes `spb` batch samples packed along the lane axis.
# Layout: (channels, flat-spatial); each sample owns a Lslab-wide lane slab.
# ---------------------------------------------------------------------------
def _make_fused_kernel(cin, cout, h, w, spb, lslab):
    wp = w + 2                                   # padded width
    taps = [kh * wp + kw for kh in range(3) for kw in range(3)]
    off = wp + 1                                 # (1,1) shift inside the padded slab
    lw = spb * lslab                             # wide (lane) extent per grid step
    n1 = float(cout * h * w)                     # GN1 valid element count per sample
    n2 = float(cout * (h // 2) * (w // 2))       # GN2 valid element count per sample

    def _erf(z):
        # Abramowitz-Stegun 7.1.26 polynomial, |error| <= 1.5e-7 (exact GELU
        # to float32 noise level); exp lands on the EUP slot.
        az = jnp.abs(z)
        t = 1.0 / (1.0 + 0.3275911 * az)
        poly = t * (0.254829592 + t * (-0.284496736 + t * (1.421413741
                    + t * (-1.453152027 + t * 1.061405429))))
        e = 1.0 - poly * jnp.exp(-az * az)
        return jnp.where(z < 0.0, -e, e)

    def _gn_segment(acc_seg, m_seg, n_elems, g, b):
        # Fused one-pass stats: per-column partials, then ONE lane reduction
        # over the stacked [sum ; sum_sq] rows.
        am = acc_seg * m_seg                                     # masked
        colsum = jnp.sum(am, axis=0, keepdims=True)              # (1, Lslab)
        colsq = jnp.sum(am * acc_seg, axis=0, keepdims=True)     # (1, Lslab)
        ss = jnp.sum(jnp.concatenate([colsum, colsq], axis=0),
                     axis=1, keepdims=True)                      # (2, 1)
        mean = ss[0:1] / n_elems                                 # (1, 1)
        var = jnp.maximum(ss[1:2] / n_elems - mean * mean, 0.0)  # (1, 1)
        y = (acc_seg - mean) * lax.rsqrt(var + jnp.float32(_EPS))
        return y * g + b

    def kernel(xf_ref, w1_ref, w2_ref, m1_ref, m2_ref,
               g1_ref, b1_ref, g2_ref, b2_ref, o_ref, y1_ref):
        # xf_ref: (1, Cin, Ltot)   bf16  batch-packed, padded, flattened input
        # w1_ref: (Cout, 9*Cin)    bf16  conv1 weights, K-packed (tap-major)
        # w2_ref: (Cout, 9*Cout)   bf16  conv2 weights, K-packed
        # m1_ref: (1, Lw)          f32   stage-1 validity mask
        # m2_ref: (1, Lw)          f32   stage-2 (stride-2) validity mask
        # g*/b* : (Cout, 1)        f32   GroupNorm affine params
        # o_ref : (1, Cout, Lw)    f32   lane-dense wide GN2 output
        # y1_ref: (Cout, Ltot)     bf16  VMEM scratch: padded stage-1 slab

        # zero the stage-1 activation slab once per step (pad lanes stay 0)
        y1_ref[...] = jnp.zeros_like(y1_ref)

        # ---- conv1: K-packed 9-tap single MXU matmul ------------------------
        p1 = jnp.concatenate([xf_ref[0, :, t:t + lw] for t in taps], axis=0)  # (9*Cin, Lw)
        acc1 = jnp.dot(w1_ref[...], p1,
                       preferred_element_type=jnp.float32)                    # (Cout, Lw) f32

        g1 = g1_ref[...]
        b1 = b1_ref[...]

        # ---- GN1 + exact GELU per sample; write padded slab into scratch ----
        for s in range(spb):
            sl = slice(s * lslab, (s + 1) * lslab)
            m1s = m1_ref[:, sl]
            y = _gn_segment(acc1[:, sl], m1s, n1, g1, b1)
            y = 0.5 * y * (1.0 + _erf(y * jnp.float32(_INV_SQRT2)))
            # invalid wide columns become conv2's zero padding
            y = (y * m1s).astype(jnp.bfloat16)                                # (Cout, Lslab)
            y1_ref[:, pl.ds(s * lslab + off, lslab)] = y

        # ---- conv2 (wide): K-packed taps straight from the scratch slab -----
        p2 = jnp.concatenate([y1_ref[:, t:t + lw] for t in taps], axis=0)     # (9*Cout, Lw)
        acc2 = jnp.dot(w2_ref[...], p2,
                       preferred_element_type=jnp.float32)                    # (Cout, Lw) f32

        g2 = g2_ref[...]
        b2 = b2_ref[...]

        # ---- GN2: masked (stride-2) stats per sample, lane-dense store ------
        for s in range(spb):
            sl = slice(s * lslab, (s + 1) * lslab)
            y2 = _gn_segment(acc2[:, sl], m2_ref[:, sl], n2, g2, b2)
            o_ref[0, :, sl] = y2

    return kernel


# ---------------------------------------------------------------------------
# DownBlock forward (NCHW in, NCHW out, like the PyTorch module).
# ---------------------------------------------------------------------------
@jax.jit
def down_block_forward(x_nchw, params):
    x = x_nchw.astype(jnp.float32)
    n, cin, h, w = x.shape
    cout = params["w1"].shape[0]
    hp, wp = h + 2, w + 2
    ho, wo = h // 2, w // 2

    # batch packing: one grid step holds all samples on the lane axis.
    # (on v7x one would use spb = ceil(n/2) + a "parallel" grid axis so both
    #  TensorCores get work; at this size one step minimizes step overhead.)
    spb = n
    nblk = n // spb
    lslab = _round_up(hp * wp, 128)              # per-sample lane slab (384)
    lw_blk = spb * lslab                         # wide lane extent per block
    ltot_blk = lw_blk + _round_up(2 * wp + 2, 128)  # + tap-overhang tail

    # pad spatially (zeros), flatten per sample, pack samples onto lanes
    xp = jnp.pad(x, ((0, 0), (0, 0), (1, 1), (1, 1)))            # (N, Cin, Hp, Wp)
    xf = xp.reshape(n, cin, hp * wp)
    xf = jnp.pad(xf, ((0, 0), (0, 0), (0, lslab - hp * wp)))     # (N, Cin, Lslab)
    xf = xf.reshape(nblk, spb, cin, lslab).transpose(0, 2, 1, 3)
    xf = xf.reshape(nblk, cin, lw_blk)
    xf = jnp.pad(xf, ((0, 0), (0, 0), (0, ltot_blk - lw_blk))).astype(jnp.bfloat16)

    # validity masks over the wide column space (same pattern for every block)
    local = jnp.arange(lw_blk, dtype=jnp.int32) % lslab
    row = local // wp
    col = local % wp
    valid1 = (row < h) & (col < w)
    m1 = valid1.astype(jnp.float32).reshape(1, lw_blk)
    m2 = (valid1 & (row % 2 == 0) & (col % 2 == 0)).astype(jnp.float32).reshape(1, lw_blk)

    g1 = params["g1"].reshape(cout, 1)
    b1 = params["b1"].reshape(cout, 1)
    g2 = params["g2"].reshape(cout, 1)
    b2 = params["b2"].reshape(cout, 1)

    kernel = _make_fused_kernel(cin, cout, h, w, spb, lslab)
    out = pl.pallas_call(
        kernel,
        out_shape=jax.ShapeDtypeStruct((nblk, cout, lw_blk), jnp.float32),
        grid=(nblk,),
        in_specs=[
            pl.BlockSpec((1, cin, ltot_blk), lambda i: (i, 0, 0)),
            pl.BlockSpec((cout, 9 * cin), lambda i: (0, 0)),
            pl.BlockSpec((cout, 9 * cout), lambda i: (0, 0)),
            pl.BlockSpec((1, lw_blk), lambda i: (0, 0)),
            pl.BlockSpec((1, lw_blk), lambda i: (0, 0)),
            pl.BlockSpec((cout, 1), lambda i: (0, 0)),
            pl.BlockSpec((cout, 1), lambda i: (0, 0)),
            pl.BlockSpec((cout, 1), lambda i: (0, 0)),
            pl.BlockSpec((cout, 1), lambda i: (0, 0)),
        ],
        out_specs=pl.BlockSpec((1, cout, lw_blk), lambda i: (i, 0, 0)),
        scratch_shapes=[pltpu.VMEM((cout, ltot_blk), jnp.bfloat16)],
        compiler_params=pltpu.CompilerParams(
            dimension_semantics=("parallel",),
        ),
    )(xf, params["w1"], params["w2"], m1, m2, g1, b1, g2, b2)

    # gather the stride-2 valid columns (layout-only strided slice in XLA)
    out = out.reshape(nblk, cout, spb, lslab)[:, :, :, :hp * wp]
    out = out.reshape(nblk, cout, spb, hp, wp)[:, :, :, 0:2 * ho:2, 0:2 * wo:2]
    out = out.transpose(0, 2, 1, 3, 4).reshape(n, cout, ho, wo)
    return out                                                    # NCHW


# ---------------------------------------------------------------------------
# Pure-JAX reference (for an on-device correctness check).
# ---------------------------------------------------------------------------
def _reference(x_nchw, params):
    x = jnp.transpose(x_nchw, (0, 2, 3, 1)).astype(jnp.float32)  # NHWC

    def gn(y, g, b):
        mean = jnp.mean(y, axis=(1, 2, 3), keepdims=True)
        var = jnp.mean((y - mean) ** 2, axis=(1, 2, 3), keepdims=True)
        return (y - mean) * lax.rsqrt(var + _EPS) * g + b

    y = lax.conv_general_dilated(
        x, params["w1_hwio"], (1, 1), ((1, 1), (1, 1)),
        dimension_numbers=("NHWC", "HWIO", "NHWC"))
    y = gn(y, params["g1"], params["b1"])
    y = 0.5 * y * (1.0 + lax.erf(y * _INV_SQRT2))
    y = lax.conv_general_dilated(
        y, params["w2_hwio"], (2, 2), ((1, 1), (1, 1)),
        dimension_numbers=("NHWC", "HWIO", "NHWC"))
    y = gn(y, params["g2"], params["b2"])
    return jnp.transpose(y, (0, 3, 1, 2))  # NCHW


def init_params(key, in_channels, out_channels):
    k1, k2, k3, k4, k5, k6 = jax.random.split(key, 6)
    fan1 = in_channels * 9
    fan2 = out_channels * 9
    # weights are bf16-representable so kernel (bf16 MXU operands) and f32
    # reference consume identical weight values
    w1_hwio = jax.random.normal(k1, (3, 3, in_channels, out_channels), jnp.float32)
    w1_hwio = (w1_hwio / math.sqrt(fan1)).astype(jnp.bfloat16).astype(jnp.float32)
    w2_hwio = jax.random.normal(k2, (3, 3, out_channels, out_channels), jnp.float32)
    w2_hwio = (w2_hwio / math.sqrt(fan2)).astype(jnp.bfloat16).astype(jnp.float32)
    return {
        "w1_hwio": w1_hwio,
        "w2_hwio": w2_hwio,
        # K-packed kernel weights: (Cout, 9*Cin), column = tap*Cin + cin
        "w1": w1_hwio.reshape(9 * in_channels, out_channels).T.astype(jnp.bfloat16),
        "w2": w2_hwio.reshape(9 * out_channels, out_channels).T.astype(jnp.bfloat16),
        # GroupNorm affine params (non-trivial values to exercise broadcast)
        "g1": 1.0 + 0.1 * jax.random.normal(k3, (out_channels,), jnp.float32),
        "b1": 0.1 * jax.random.normal(k4, (out_channels,), jnp.float32),
        "g2": 1.0 + 0.1 * jax.random.normal(k5, (out_channels,), jnp.float32),
        "b2": 0.1 * jax.random.normal(k6, (out_channels,), jnp.float32),
    }


if __name__ == "__main__":
    key = jax.random.PRNGKey(0)
    k_x, k_p = jax.random.split(key)

    batch, cin, cout, spatial = 2, 4, 8, 16
    x = jax.random.normal(k_x, (batch, cin, spatial, spatial), jnp.float32)
    # round the input to bf16-representable values so kernel (bf16 MXU inputs)
    # and f32 reference see the same operand values
    x = x.astype(jnp.bfloat16).astype(jnp.float32)
    params = init_params(k_p, cin, cout)

    out = jax.block_until_ready(down_block_forward(x, params))
    assert out.shape == (batch, cout, spatial // 2, spatial // 2), out.shape

    ref = jax.block_until_ready(_reference(x, params))
    max_err = float(jnp.max(jnp.abs(out - ref)))
    # tolerance accounts for the bf16 intermediate activation / bf16 MXU ops
    assert jnp.allclose(out, ref, atol=5e-2, rtol=5e-2), max_err

    print("KERNEL_OK")
</pallas_src>

<mosaic_0001>
module attributes {stable_mosaic.version = 11 : i64} {
  func.func @kernel(%arg0: i32, %arg1: memref<1x4x896xbf16, #tpu.memory_space<vmem>>, %arg2: memref<8x36xbf16, #tpu.memory_space<vmem>>, %arg3: memref<8x72xbf16, #tpu.memory_space<vmem>>, %arg4: memref<1x768xf32, #tpu.memory_space<vmem>>, %arg5: memref<1x768xf32, #tpu.memory_space<vmem>>, %arg6: memref<8x1xf32, #tpu.memory_space<vmem>>, %arg7: memref<8x1xf32, #tpu.memory_space<vmem>>, %arg8: memref<8x1xf32, #tpu.memory_space<vmem>>, %arg9: memref<8x1xf32, #tpu.memory_space<vmem>>, %arg10: memref<1x8x768xf32, #tpu.memory_space<vmem>>, %arg11: memref<8x896xbf16, #tpu.memory_space<vmem>>) attributes {dimension_semantics = [#tpu.dimension_semantics<parallel>], iteration_bounds = array<i64: 1>, scalar_prefetch = 0 : i64, scratch_operands = 1 : i64, tpu.core_type = #tpu.core_type<tc>, window_params = [{transform_indices = @transform_0, window_bounds = array<i64: 1, 4, 896>}, {pipeline_mode = #tpu.pipeline_mode<synchronous>, transform_indices = @transform_1, window_bounds = array<i64: 8, 36>}, {pipeline_mode = #tpu.pipeline_mode<synchronous>, transform_indices = @transform_2, window_bounds = array<i64: 8, 72>}, {pipeline_mode = #tpu.pipeline_mode<synchronous>, transform_indices = @transform_3, window_bounds = array<i64: 1, 768>}, {pipeline_mode = #tpu.pipeline_mode<synchronous>, transform_indices = @transform_4, window_bounds = array<i64: 1, 768>}, {pipeline_mode = #tpu.pipeline_mode<synchronous>, transform_indices = @transform_5, window_bounds = array<i64: 8, 1>}, {pipeline_mode = #tpu.pipeline_mode<synchronous>, transform_indices = @transform_6, window_bounds = array<i64: 8, 1>}, {pipeline_mode = #tpu.pipeline_mode<synchronous>, transform_indices = @transform_7, window_bounds = array<i64: 8, 1>}, {pipeline_mode = #tpu.pipeline_mode<synchronous>, transform_indices = @transform_8, window_bounds = array<i64: 8, 1>}, {transform_indices = @transform_9, window_bounds = array<i64: 1, 8, 768>}]} {
    %cst = arith.constant 0.000000e+00 : bf16
    %0 = vector.broadcast %cst : bf16 to vector<8x896xbf16>
    %c0 = arith.constant 0 : index
    %c0_0 = arith.constant 0 : index
    %1 = vector.load %arg11[%c0, %c0_0] : memref<8x896xbf16, #tpu.memory_space<vmem>>, vector<8x896xbf16>
    tpu.vector_store %arg11[%c0, %c0_0], %0 {strides = array<i32>} : memref<8x896xbf16, #tpu.memory_space<vmem>>, vector<8x896xbf16>,
    %c0_1 = arith.constant 0 : index
    %c0_2 = arith.constant 0 : index
    %c0_3 = arith.constant 0 : index
    %2 = vector.load %arg1[%c0_1, %c0_2, %c0_3] : memref<1x4x896xbf16, #tpu.memory_space<vmem>>, vector<1x4x768xbf16>
    %3 = vector.shape_cast %2 : vector<1x4x768xbf16> to vector<4x768xbf16>
    %c0_4 = arith.constant 0 : index
    %c0_5 = arith.constant 0 : index
    %c1 = arith.constant 1 : index
    %4 = vector.load %arg1[%c0_4, %c0_5, %c1] : memref<1x4x896xbf16, #tpu.memory_space<vmem>>, vector<1x4x768xbf16>
    %5 = vector.shape_cast %4 : vector<1x4x768xbf16> to vector<4x768xbf16>
    %c0_6 = arith.constant 0 : index
    %c0_7 = arith.constant 0 : index
    %c2 = arith.constant 2 : index
    %6 = vector.load %arg1[%c0_6, %c0_7, %c2] : memref<1x4x896xbf16, #tpu.memory_space<vmem>>, vector<1x4x768xbf16>
    %7 = vector.shape_cast %6 : vector<1x4x768xbf16> to vector<4x768xbf16>
    %c0_8 = arith.constant 0 : index
    %c0_9 = arith.constant 0 : index
    %c18 = arith.constant 18 : index
    %8 = vector.load %arg1[%c0_8, %c0_9, %c18] : memref<1x4x896xbf16, #tpu.memory_space<vmem>>, vector<1x4x768xbf16>
    %9 = vector.shape_cast %8 : vector<1x4x768xbf16> to vector<4x768xbf16>
    %c0_10 = arith.constant 0 : index
    %c0_11 = arith.constant 0 : index
    %c19 = arith.constant 19 : index
    %10 = vector.load %arg1[%c0_10, %c0_11, %c19] : memref<1x4x896xbf16, #tpu.memory_space<vmem>>, vector<1x4x768xbf16>
    %11 = vector.shape_cast %10 : vector<1x4x768xbf16> to vector<4x768xbf16>
    %c0_12 = arith.constant 0 : index
    %c0_13 = arith.constant 0 : index
    %c20 = arith.constant 20 : index
    %12 = vector.load %arg1[%c0_12, %c0_13, %c20] : memref<1x4x896xbf16, #tpu.memory_space<vmem>>, vector<1x4x768xbf16>
    %13 = vector.shape_cast %12 : vector<1x4x768xbf16> to vector<4x768xbf16>
    %c0_14 = arith.constant 0 : index
    %c0_15 = arith.constant 0 : index
    %c36 = arith.constant 36 : index
    %14 = vector.load %arg1[%c0_14, %c0_15, %c36] : memref<1x4x896xbf16, #tpu.memory_space<vmem>>, vector<1x4x768xbf16>
    %15 = vector.shape_cast %14 : vector<1x4x768xbf16> to vector<4x768xbf16>
    %c0_16 = arith.constant 0 : index
    %c0_17 = arith.constant 0 : index
    %c37 = arith.constant 37 : index
    %16 = vector.load %arg1[%c0_16, %c0_17, %c37] : memref<1x4x896xbf16, #tpu.memory_space<vmem>>, vector<1x4x768xbf16>
    %17 = vector.shape_cast %16 : vector<1x4x768xbf16> to vector<4x768xbf16>
    %c0_18 = arith.constant 0 : index
    %c0_19 = arith.constant 0 : index
    %c38 = arith.constant 38 : index
    %18 = vector.load %arg1[%c0_18, %c0_19, %c38] : memref<1x4x896xbf16, #tpu.memory_space<vmem>>, vector<1x4x768xbf16>
    %19 = vector.shape_cast %18 : vector<1x4x768xbf16> to vector<4x768xbf16>
    %20 = tpu.concatenate %3, %5, %7, %9, %11, %13, %15, %17, %19 in 0 : vector<4x768xbf16>, vector<4x768xbf16>, vector<4x768xbf16>, vector<4x768xbf16>, vector<4x768xbf16>, vector<4x768xbf16>, vector<4x768xbf16>, vector<4x768xbf16>, vector<4x768xbf16> -> vector<36x768xbf16>
    %c0_20 = arith.constant 0 : index
    %c0_21 = arith.constant 0 : index
    %21 = vector.load %arg2[%c0_20, %c0_21] : memref<8x36xbf16, #tpu.memory_space<vmem>>, vector<8x36xbf16>
    %cst_22 = arith.constant dense<0.000000e+00> : vector<8x768xf32>
    %22 = tpu.matmul %21, %20, %cst_22 {dimension_numbers = #tpu.dot_dimension_numbers<[1], [0], [0], [1], [0, 0, 1, 1], [], []>} : vector<8x36xbf16>, vector<36x768xbf16>, vector<8x768xf32> -> vector<8x768xf32>
    %c0_23 = arith.constant 0 : index
    %c0_24 = arith.constant 0 : index
    %23 = vector.load %arg6[%c0_23, %c0_24] : memref<8x1xf32, #tpu.memory_space<vmem>>, vector<8x1xf32>
    %c0_25 = arith.constant 0 : index
    %c0_26 = arith.constant 0 : index
    %24 = vector.load %arg7[%c0_25, %c0_26] : memref<8x1xf32, #tpu.memory_space<vmem>>, vector<8x1xf32>
    %c0_27 = arith.constant 0 : index
    %c0_28 = arith.constant 0 : index
    %25 = vector.load %arg4[%c0_27, %c0_28] : memref<1x768xf32, #tpu.memory_space<vmem>>, vector<1x384xf32>
    %26 = vector.extract_strided_slice %22 {offsets = [0, 0], sizes = [8, 384], strides = [1, 1]} : vector<8x768xf32> to vector<8x384xf32>
    %27 = vector.broadcast %25 : vector<1x384xf32> to vector<8x384xf32>
    %28 = arith.mulf %26, %27 : vector<8x384xf32>
    %cst_29 = arith.constant dense<0.000000e+00> : vector<384xf32>
    %29 = vector.multi_reduction <add>, %28, %cst_29 [0] : vector<8x384xf32> to vector<384xf32>
    %30 = vector.shape_cast %29 : vector<384xf32> to vector<1x384xf32>
    %31 = arith.mulf %28, %26 : vector<8x384xf32>
    %cst_30 = arith.constant dense<0.000000e+00> : vector<384xf32>
    %32 = vector.multi_reduction <add>, %31, %cst_30 [0] : vector<8x384xf32> to vector<384xf32>
    %33 = vector.shape_cast %32 : vector<384xf32> to vector<1x384xf32>
    %34 = tpu.concatenate %30, %33 in 0 : vector<1x384xf32>, vector<1x384xf32> -> vector<2x384xf32>
    %cst_31 = arith.constant dense<0.000000e+00> : vector<2xf32>
    %35 = vector.multi_reduction <add>, %34, %cst_31 [1] : vector<2x384xf32> to vector<2xf32>
    %36 = vector.shape_cast %35 : vector<2xf32> to vector<2x1xf32>
    %37 = vector.extract_strided_slice %36 {offsets = [0, 0], sizes = [1, 1], strides = [1, 1]} : vector<2x1xf32> to vector<1x1xf32>
    %cst_32 = arith.constant 2.048000e+03 : f32
    %38 = vector.broadcast %cst_32 : f32 to vector<1x1xf32>
    %39 = arith.divf %37, %38 : vector<1x1xf32>
    %40 = vector.extract_strided_slice %36 {offsets = [1, 0], sizes = [1, 1], strides = [1, 1]} : vector<2x1xf32> to vector<1x1xf32>
    %cst_33 = arith.constant 2.048000e+03 : f32
    %41 = vector.broadcast %cst_33 : f32 to vector<1x1xf32>
    %42 = arith.divf %40, %41 : vector<1x1xf32>
    %43 = arith.mulf %39, %39 : vector<1x1xf32>
    %44 = arith.subf %42, %43 : vector<1x1xf32>
    %cst_34 = arith.constant 0.000000e+00 : f32
    %45 = vector.broadcast %cst_34 : f32 to vector<1x1xf32>
    %46 = arith.maximumf %44, %45 : vector<1x1xf32>
    %47 = vector.broadcast %39 : vector<1x1xf32> to vector<8x384xf32>
    %48 = arith.subf %26, %47 : vector<8x384xf32>
    %cst_35 = arith.constant 9.99999974E-6 : f32
    %49 = vector.broadcast %cst_35 : f32 to vector<1x1xf32>
    %50 = arith.addf %46, %49 : vector<1x1xf32>
    %51 = math.rsqrt %50 : vector<1x1xf32>
    %52 = vector.broadcast %51 : vector<1x1xf32> to vector<8x384xf32>
    %53 = arith.mulf %48, %52 : vector<8x384xf32>
    %54 = vector.broadcast %23 : vector<8x1xf32> to vector<8x384xf32>
    %55 = arith.mulf %53, %54 : vector<8x384xf32>
    %56 = vector.broadcast %24 : vector<8x1xf32> to vector<8x384xf32>
    %57 = arith.addf %55, %56 : vector<8x384xf32>
    %cst_36 = arith.constant 5.000000e-01 : f32
    %58 = vector.broadcast %cst_36 : f32 to vector<8x384xf32>
    %59 = arith.mulf %58, %57 : vector<8x384xf32>
    %cst_37 = arith.constant 0.707106769 : f32
    %60 = vector.broadcast %cst_37 : f32 to vector<8x384xf32>
    %61 = arith.mulf %57, %60 : vector<8x384xf32>
    %62 = math.absf %61 : vector<8x384xf32>
    %cst_38 = arith.constant 0.327591091 : f32
    %63 = vector.broadcast %cst_38 : f32 to vector<8x384xf32>
    %64 = arith.mulf %63, %62 : vector<8x384xf32>
    %cst_39 = arith.constant 1.000000e+00 : f32
    %65 = vector.broadcast %cst_39 : f32 to vector<8x384xf32>
    %66 = arith.addf %65, %64 : vector<8x384xf32>
    %cst_40 = arith.constant 1.000000e+00 : f32
    %67 = vector.broadcast %cst_40 : f32 to vector<8x384xf32>
    %68 = arith.divf %67, %66 : vector<8x384xf32>
    %cst_41 = arith.constant 1.06140542 : f32
    %69 = vector.broadcast %cst_41 : f32 to vector<8x384xf32>
    %70 = arith.mulf %68, %69 : vector<8x384xf32>
    %cst_42 = arith.constant -1.45315206 : f32
    %71 = vector.broadcast %cst_42 : f32 to vector<8x384xf32>
    %72 = arith.addf %71, %70 : vector<8x384xf32>
    %73 = arith.mulf %68, %72 : vector<8x384xf32>
    %cst_43 = arith.constant 1.42141378 : f32
    %74 = vector.broadcast %cst_43 : f32 to vector<8x384xf32>
    %75 = arith.addf %74, %73 : vector<8x384xf32>
    %76 = arith.mulf %68, %75 : vector<8x384xf32>
    %cst_44 = arith.constant -0.284496725 : f32
    %77 = vector.broadcast %cst_44 : f32 to vector<8x384xf32>
    %78 = arith.addf %77, %76 : vector<8x384xf32>
    %79 = arith.mulf %68, %78 : vector<8x384xf32>
    %cst_45 = arith.constant 0.254829586 : f32
    %80 = vector.broadcast %cst_45 : f32 to vector<8x384xf32>
    %81 = arith.addf %80, %79 : vector<8x384xf32>
    %82 = arith.mulf %68, %81 : vector<8x384xf32>
    %cst_46 = arith.constant 0.000000e+00 : f32
    %83 = vector.broadcast %cst_46 : f32 to vector<8x384xf32>
    %84 = arith.subf %83, %62 : vector<8x384xf32>
    %85 = arith.mulf %84, %62 : vector<8x384xf32>
    %86 = math.exp %85 : vector<8x384xf32>
    %87 = arith.mulf %82, %86 : vector<8x384xf32>
    %cst_47 = arith.constant 1.000000e+00 : f32
    %88 = vector.broadcast %cst_47 : f32 to vector<8x384xf32>
    %89 = arith.subf %88, %87 : vector<8x384xf32>
    %cst_48 = arith.constant 0.000000e+00 : f32
    %90 = vector.broadcast %cst_48 : f32 to vector<8x384xf32>
    %91 = arith.cmpf olt, %61, %90 : vector<8x384xf32>
    %cst_49 = arith.constant 0.000000e+00 : f32
    %92 = vector.broadcast %cst_49 : f32 to vector<8x384xf32>
    %93 = arith.subf %92, %89 : vector<8x384xf32>
    %94 = arith.select %91, %93, %89 : vector<8x384xi1>, vector<8x384xf32>
    %cst_50 = arith.constant 1.000000e+00 : f32
    %95 = vector.broadcast %cst_50 : f32 to vector<8x384xf32>
    %96 = arith.addf %95, %94 : vector<8x384xf32>
    %97 = arith.mulf %59, %96 : vector<8x384xf32>
    %98 = vector.broadcast %25 : vector<1x384xf32> to vector<8x384xf32>
    %99 = arith.mulf %97, %98 : vector<8x384xf32>
    %100 = arith.truncf %99 : vector<8x384xf32> to vector<8x384xbf16>
    %c0_51 = arith.constant 0 : index
    %c19_52 = arith.constant 19 : index
    %101 = vector.load %arg11[%c0_51, %c19_52] : memref<8x896xbf16, #tpu.memory_space<vmem>>, vector<8x384xbf16>
    tpu.vector_store %arg11[%c0_51, %c19_52], %100 {strides = array<i32>} : memref<8x896xbf16, #tpu.memory_space<vmem>>, vector<8x384xbf16>,
    %c0_53 = arith.constant 0 : index
    %c384 = arith.constant 384 : index
    %102 = vector.load %arg4[%c0_53, %c384] : memref<1x768xf32, #tpu.memory_space<vmem>>, vector<1x384xf32>
    %103 = vector.extract_strided_slice %22 {offsets = [0, 384], sizes = [8, 384], strides = [1, 1]} : vector<8x768xf32> to vector<8x384xf32>
    %104 = vector.broadcast %102 : vector<1x384xf32> to vector<8x384xf32>
    %105 = arith.mulf %103, %104 : vector<8x384xf32>
    %cst_54 = arith.constant dense<0.000000e+00> : vector<384xf32>
    %106 = vector.multi_reduction <add>, %105, %cst_54 [0] : vector<8x384xf32> to vector<384xf32>
    %107 = vector.shape_cast %106 : vector<384xf32> to vector<1x384xf32>
    %108 = arith.mulf %105, %103 : vector<8x384xf32>
    %cst_55 = arith.constant dense<0.000000e+00> : vector<384xf32>
    %109 = vector.multi_reduction <add>, %108, %cst_55 [0] : vector<8x384xf32> to vector<384xf32>
    %110 = vector.shape_cast %109 : vector<384xf32> to vector<1x384xf32>
    %111 = tpu.concatenate %107, %110 in 0 : vector<1x384xf32>, vector<1x384xf32> -> vector<2x384xf32>
    %cst_56 = arith.constant dense<0.000000e+00> : vector<2xf32>
    %112 = vector.multi_reduction <add>, %111, %cst_56 [1] : vector<2x384xf32> to vector<2xf32>
    %113 = vector.shape_cast %112 : vector<2xf32> to vector<2x1xf32>
    %114 = vector.extract_strided_slice %113 {offsets = [0, 0], sizes = [1, 1], strides = [1, 1]} : vector<2x1xf32> to vector<1x1xf32>
    %cst_57 = arith.constant 2.048000e+03 : f32
    %115 = vector.broadcast %cst_57 : f32 to vector<1x1xf32>
    %116 = arith.divf %114, %115 : vector<1x1xf32>
    %117 = vector.extract_strided_slice %113 {offsets = [1, 0], sizes = [1, 1], strides = [1, 1]} : vector<2x1xf32> to vector<1x1xf32>
    %cst_58 = arith.constant 2.048000e+03 : f32
    %118 = vector.broadcast %cst_58 : f32 to vector<1x1xf32>
    %119 = arith.divf %117, %118 : vector<1x1xf32>
    %120 = arith.mulf %116, %116 : vector<1x1xf32>
    %121 = arith.subf %119, %120 : vector<1x1xf32>
    %cst_59 = arith.constant 0.000000e+00 : f32
    %122 = vector.broadcast %cst_59 : f32 to vector<1x1xf32>
    %123 = arith.maximumf %121, %122 : vector<1x1xf32>
    %124 = vector.broadcast %116 : vector<1x1xf32> to vector<8x384xf32>
    %125 = arith.subf %103, %124 : vector<8x384xf32>
    %cst_60 = arith.constant 9.99999974E-6 : f32
    %126 = vector.broadcast %cst_60 : f32 to vector<1x1xf32>
    %127 = arith.addf %123, %126 : vector<1x1xf32>
    %128 = math.rsqrt %127 : vector<1x1xf32>
    %129 = vector.broadcast %128 : vector<1x1xf32> to vector<8x384xf32>
    %130 = arith.mulf %125, %129 : vector<8x384xf32>
    %131 = vector.broadcast %23 : vector<8x1xf32> to vector<8x384xf32>
    %132 = arith.mulf %130, %131 : vector<8x384xf32>
    %133 = vector.broadcast %24 : vector<8x1xf32> to vector<8x384xf32>
    %134 = arith.addf %132, %133 : vector<8x384xf32>
    %cst_61 = arith.constant 5.000000e-01 : f32
    %135 = vector.broadcast %cst_61 : f32 to vector<8x384xf32>
    %136 = arith.mulf %135, %134 : vector<8x384xf32>
    %cst_62 = arith.constant 0.707106769 : f32
    %137 = vector.broadcast %cst_62 : f32 to vector<8x384xf32>
    %138 = arith.mulf %134, %137 : vector<8x384xf32>
    %139 = math.absf %138 : vector<8x384xf32>
    %cst_63 = arith.constant 0.327591091 : f32
    %140 = vector.broadcast %cst_63 : f32 to vector<8x384xf32>
    %141 = arith.mulf %140, %139 : vector<8x384xf32>
    %cst_64 = arith.constant 1.000000e+00 : f32
    %142 = vector.broadcast %cst_64 : f32 to vector<8x384xf32>
    %143 = arith.addf %142, %141 : vector<8x384xf32>
    %cst_65 = arith.constant 1.000000e+00 : f32
    %144 = vector.broadcast %cst_65 : f32 to vector<8x384xf32>
    %145 = arith.divf %144, %143 : vector<8x384xf32>
    %cst_66 = arith.constant 1.06140542 : f32
    %146 = vector.broadcast %cst_66 : f32 to vector<8x384xf32>
    %147 = arith.mulf %145, %146 : vector<8x384xf32>
    %cst_67 = arith.constant -1.45315206 : f32
    %148 = vector.broadcast %cst_67 : f32 to vector<8x384xf32>
    %149 = arith.addf %148, %147 : vector<8x384xf32>
    %150 = arith.mulf %145, %149 : vector<8x384xf32>
    %cst_68 = arith.constant 1.42141378 : f32
    %151 = vector.broadcast %cst_68 : f32 to vector<8x384xf32>
    %152 = arith.addf %151, %150 : vector<8x384xf32>
    %153 = arith.mulf %145, %152 : vector<8x384xf32>
    %cst_69 = arith.constant -0.284496725 : f32
    %154 = vector.broadcast %cst_69 : f32 to vector<8x384xf32>
    %155 = arith.addf %154, %153 : vector<8x384xf32>
    %156 = arith.mulf %145, %155 : vector<8x384xf32>
    %cst_70 = arith.constant 0.254829586 : f32
    %157 = vector.broadcast %cst_70 : f32 to vector<8x384xf32>
    %158 = arith.addf %157, %156 : vector<8x384xf32>
    %159 = arith.mulf %145, %158 : vector<8x384xf32>
    %cst_71 = arith.constant 0.000000e+00 : f32
    %160 = vector.broadcast %cst_71 : f32 to vector<8x384xf32>
    %161 = arith.subf %160, %139 : vector<8x384xf32>
    %162 = arith.mulf %161, %139 : vector<8x384xf32>
    %163 = math.exp %162 : vector<8x384xf32>
    %164 = arith.mulf %159, %163 : vector<8x384xf32>
    %cst_72 = arith.constant 1.000000e+00 : f32
    %165 = vector.broadcast %cst_72 : f32 to vector<8x384xf32>
    %166 = arith.subf %165, %164 : vector<8x384xf32>
    %cst_73 = arith.constant 0.000000e+00 : f32
    %167 = vector.broadcast %cst_73 : f32 to vector<8x384xf32>
    %168 = arith.cmpf olt, %138, %167 : vector<8x384xf32>
    %cst_74 = arith.constant 0.000000e+00 : f32
    %169 = vector.broadcast %cst_74 : f32 to vector<8x384xf32>
    %170 = arith.subf %169, %166 : vector<8x384xf32>
    %171 = arith.select %168, %170, %166 : vector<8x384xi1>, vector<8x384xf32>
    %cst_75 = arith.constant 1.000000e+00 : f32
    %172 = vector.broadcast %cst_75 : f32 to vector<8x384xf32>
    %173 = arith.addf %172, %171 : vector<8x384xf32>
    %174 = arith.mulf %136, %173 : vector<8x384xf32>
    %175 = vector.broadcast %102 : vector<1x384xf32> to vector<8x384xf32>
    %176 = arith.mulf %174, %175 : vector<8x384xf32>
    %177 = arith.truncf %176 : vector<8x384xf32> to vector<8x384xbf16>
    %c0_76 = arith.constant 0 : index
    %c403 = arith.constant 403 : index
    %178 = vector.load %arg11[%c0_76, %c403] : memref<8x896xbf16, #tpu.memory_space<vmem>>, vector<8x384xbf16>
    tpu.vector_store %arg11[%c0_76, %c403], %177 {strides = array<i32>} : memref<8x896xbf16, #tpu.memory_space<vmem>>, vector<8x384xbf16>,
    %c0_77 = arith.constant 0 : index
    %c0_78 = arith.constant 0 : index
    %179 = vector.load %arg11[%c0_77, %c0_78] : memref<8x896xbf16, #tpu.memory_space<vmem>>, vector<8x768xbf16>
    %c0_79 = arith.constant 0 : index
    %c1_80 = arith.constant 1 : index
    %180 = vector.load %arg11[%c0_79, %c1_80] : memref<8x896xbf16, #tpu.memory_space<vmem>>, vector<8x768xbf16>
    %c0_81 = arith.constant 0 : index
    %c2_82 = arith.constant 2 : index
    %181 = vector.load %arg11[%c0_81, %c2_82] : memref<8x896xbf16, #tpu.memory_space<vmem>>, vector<8x768xbf16>
    %c0_83 = arith.constant 0 : index
    %c18_84 = arith.constant 18 : index
    %182 = vector.load %arg11[%c0_83, %c18_84] : memref<8x896xbf16, #tpu.memory_space<vmem>>, vector<8x768xbf16>
    %c0_85 = arith.constant 0 : index
    %c19_86 = arith.constant 19 : index
    %183 = vector.load %arg11[%c0_85, %c19_86] : memref<8x896xbf16, #tpu.memory_space<vmem>>, vector<8x768xbf16>
    %c0_87 = arith.constant 0 : index
    %c20_88 = arith.constant 20 : index
    %184 = vector.load %arg11[%c0_87, %c20_88] : memref<8x896xbf16, #tpu.memory_space<vmem>>, vector<8x768xbf16>
    %c0_89 = arith.constant 0 : index
    %c36_90 = arith.constant 36 : index
    %185 = vector.load %arg11[%c0_89, %c36_90] : memref<8x896xbf16, #tpu.memory_space<vmem>>, vector<8x768xbf16>
    %c0_91 = arith.constant 0 : index
    %c37_92 = arith.constant 37 : index
    %186 = vector.load %arg11[%c0_91, %c37_92] : memref<8x896xbf16, #tpu.memory_space<vmem>>, vector<8x768xbf16>
    %c0_93 = arith.constant 0 : index
    %c38_94 = arith.constant 38 : index
    %187 = vector.load %arg11[%c0_93, %c38_94] : memref<8x896xbf16, #tpu.memory_space<vmem>>, vector<8x768xbf16>
    %188 = tpu.concatenate %179, %180, %181, %182, %183, %184, %185, %186, %187 in 0 : vector<8x768xbf16>, vector<8x768xbf16>, vector<8x768xbf16>, vector<8x768xbf16>, vector<8x768xbf16>, vector<8x768xbf16>, vector<8x768xbf16>, vector<8x768xbf16>, vector<8x768xbf16> -> vector<72x768xbf16>
    %c0_95 = arith.constant 0 : index
    %c0_96 = arith.constant 0 : index
    %189 = vector.load %arg3[%c0_95, %c0_96] : memref<8x72xbf16, #tpu.memory_space<vmem>>, vector<8x72xbf16>
    %cst_97 = arith.constant dense<0.000000e+00> : vector<8x768xf32>
    %190 = tpu.matmul %189, %188, %cst_97 {dimension_numbers = #tpu.dot_dimension_numbers<[1], [0], [0], [1], [0, 0, 1, 1], [], []>} : vector<8x72xbf16>, vector<72x768xbf16>, vector<8x768xf32> -> vector<8x768xf32>
    %c0_98 = arith.constant 0 : index
    %c0_99 = arith.constant 0 : index
    %191 = vector.load %arg8[%c0_98, %c0_99] : memref<8x1xf32, #tpu.memory_space<vmem>>, vector<8x1xf32>
    %c0_100 = arith.constant 0 : index
    %c0_101 = arith.constant 0 : index
    %192 = vector.load %arg9[%c0_100, %c0_101] : memref<8x1xf32, #tpu.memory_space<vmem>>, vector<8x1xf32>
    %193 = vector.extract_strided_slice %190 {offsets = [0, 0], sizes = [8, 384], strides = [1, 1]} : vector<8x768xf32> to vector<8x384xf32>
    %c0_102 = arith.constant 0 : index
    %c0_103 = arith.constant 0 : index
    %194 = vector.load %arg5[%c0_102, %c0_103] : memref<1x768xf32, #tpu.memory_space<vmem>>, vector<1x384xf32>
    %195 = vector.broadcast %194 : vector<1x384xf32> to vector<8x384xf32>
    %196 = arith.mulf %193, %195 : vector<8x384xf32>
    %cst_104 = arith.constant dense<0.000000e+00> : vector<384xf32>
    %197 = vector.multi_reduction <add>, %196, %cst_104 [0] : vector<8x384xf32> to vector<384xf32>
    %198 = vector.shape_cast %197 : vector<384xf32> to vector<1x384xf32>
    %199 = arith.mulf %196, %193 : vector<8x384xf32>
    %cst_105 = arith.constant dense<0.000000e+00> : vector<384xf32>
    %200 = vector.multi_reduction <add>, %199, %cst_105 [0] : vector<8x384xf32> to vector<384xf32>
    %201 = vector.shape_cast %200 : vector<384xf32> to vector<1x384xf32>
    %202 = tpu.concatenate %198, %201 in 0 : vector<1x384xf32>, vector<1x384xf32> -> vector<2x384xf32>
    %cst_106 = arith.constant dense<0.000000e+00> : vector<2xf32>
    %203 = vector.multi_reduction <add>, %202, %cst_106 [1] : vector<2x384xf32> to vector<2xf32>
    %204 = vector.shape_cast %203 : vector<2xf32> to vector<2x1xf32>
    %205 = vector.extract_strided_slice %204 {offsets = [0, 0], sizes = [1, 1], strides = [1, 1]} : vector<2x1xf32> to vector<1x1xf32>
    %cst_107 = arith.constant 5.120000e+02 : f32
    %206 = vector.broadcast %cst_107 : f32 to vector<1x1xf32>
    %207 = arith.divf %205, %206 : vector<1x1xf32>
    %208 = vector.extract_strided_slice %204 {offsets = [1, 0], sizes = [1, 1], strides = [1, 1]} : vector<2x1xf32> to vector<1x1xf32>
    %cst_108 = arith.constant 5.120000e+02 : f32
    %209 = vector.broadcast %cst_108 : f32 to vector<1x1xf32>
    %210 = arith.divf %208, %209 : vector<1x1xf32>
    %211 = arith.mulf %207, %207 : vector<1x1xf32>
    %212 = arith.subf %210, %211 : vector<1x1xf32>
    %cst_109 = arith.constant 0.000000e+00 : f32
    %213 = vector.broadcast %cst_109 : f32 to vector<1x1xf32>
    %214 = arith.maximumf %212, %213 : vector<1x1xf32>
    %215 = vector.broadcast %207 : vector<1x1xf32> to vector<8x384xf32>
    %216 = arith.subf %193, %215 : vector<8x384xf32>
    %cst_110 = arith.constant 9.99999974E-6 : f32
    %217 = vector.broadcast %cst_110 : f32 to vector<1x1xf32>
    %218 = arith.addf %214, %217 : vector<1x1xf32>
    %219 = math.rsqrt %218 : vector<1x1xf32>
    %220 = vector.broadcast %219 : vector<1x1xf32> to vector<8x384xf32>
    %221 = arith.mulf %216, %220 : vector<8x384xf32>
    %222 = vector.broadcast %191 : vector<8x1xf32> to vector<8x384xf32>
    %223 = arith.mulf %221, %222 : vector<8x384xf32>
    %224 = vector.broadcast %192 : vector<8x1xf32> to vector<8x384xf32>
    %225 = arith.addf %223, %224 : vector<8x384xf32>
    %c0_111 = arith.constant 0 : index
    %c0_112 = arith.constant 0 : index
    %c0_113 = arith.constant 0 : index
    %226 = vector.load %arg10[%c0_111, %c0_112, %c0_113] : memref<1x8x768xf32, #tpu.memory_space<vmem>>, vector<1x8x384xf32>
    %227 = vector.shape_cast %226 : vector<1x8x384xf32> to vector<8x384xf32>
    %228 = vector.shape_cast %225 : vector<8x384xf32> to vector<1x8x384xf32>
    tpu.vector_store %arg10[%c0_111, %c0_112, %c0_113], %228 {strides = array<i32>} : memref<1x8x768xf32, #tpu.memory_space<vmem>>, vector<1x8x384xf32>,
    %229 = vector.extract_strided_slice %190 {offsets = [0, 384], sizes = [8, 384], strides = [1, 1]} : vector<8x768xf32> to vector<8x384xf32>
    %c0_114 = arith.constant 0 : index
    %c384_115 = arith.constant 384 : index
    %230 = vector.load %arg5[%c0_114, %c384_115] : memref<1x768xf32, #tpu.memory_space<vmem>>, vector<1x384xf32>
    %231 = vector.broadcast %230 : vector<1x384xf32> to vector<8x384xf32>
    %232 = arith.mulf %229, %231 : vector<8x384xf32>
    %cst_116 = arith.constant dense<0.000000e+00> : vector<384xf32>
    %233 = vector.multi_reduction <add>, %232, %cst_116 [0] : vector<8x384xf32> to vector<384xf32>
    %234 = vector.shape_cast %233 : vector<384xf32> to vector<1x384xf32>
    %235 = arith.mulf %232, %229 : vector<8x384xf32>
    %cst_117 = arith.constant dense<0.000000e+00> : vector<384xf32>
    %236 = vector.multi_reduction <add>, %235, %cst_117 [0] : vector<8x384xf32> to vector<384xf32>
    %237 = vector.shape_cast %236 : vector<384xf32> to vector<1x384xf32>
    %238 = tpu.concatenate %234, %237 in 0 : vector<1x384xf32>, vector<1x384xf32> -> vector<2x384xf32>
    %cst_118 = arith.constant dense<0.000000e+00> : vector<2xf32>
    %239 = vector.multi_reduction <add>, %238, %cst_118 [1] : vector<2x384xf32> to vector<2xf32>
    %240 = vector.shape_cast %239 : vector<2xf32> to vector<2x1xf32>
    %241 = vector.extract_strided_slice %240 {offsets = [0, 0], sizes = [1, 1], strides = [1, 1]} : vector<2x1xf32> to vector<1x1xf32>
    %cst_119 = arith.constant 5.120000e+02 : f32
    %242 = vector.broadcast %cst_119 : f32 to vector<1x1xf32>
    %243 = arith.divf %241, %242 : vector<1x1xf32>
    %244 = vector.extract_strided_slice %240 {offsets = [1, 0], sizes = [1, 1], strides = [1, 1]} : vector<2x1xf32> to vector<1x1xf32>
    %cst_120 = arith.constant 5.120000e+02 : f32
    %245 = vector.broadcast %cst_120 : f32 to vector<1x1xf32>
    %246 = arith.divf %244, %245 : vector<1x1xf32>
    %247 = arith.mulf %243, %243 : vector<1x1xf32>
    %248 = arith.subf %246, %247 : vector<1x1xf32>
    %cst_121 = arith.constant 0.000000e+00 : f32
    %249 = vector.broadcast %cst_121 : f32 to vector<1x1xf32>
    %250 = arith.maximumf %248, %249 : vector<1x1xf32>
    %251 = vector.broadcast %243 : vector<1x1xf32> to vector<8x384xf32>
    %252 = arith.subf %229, %251 : vector<8x384xf32>
    %cst_122 = arith.constant 9.99999974E-6 : f32
    %253 = vector.broadcast %cst_122 : f32 to vector<1x1xf32>
    %254 = arith.addf %250, %253 : vector<1x1xf32>
    %255 = math.rsqrt %254 : vector<1x1xf32>
    %256 = vector.broadcast %255 : vector<1x1xf32> to vector<8x384xf32>
    %257 = arith.mulf %252, %256 : vector<8x384xf32>
    %258 = vector.broadcast %191 : vector<8x1xf32> to vector<8x384xf32>
    %259 = arith.mulf %257, %258 : vector<8x384xf32>
    %260 = vector.broadcast %192 : vector<8x1xf32> to vector<8x384xf32>
    %261 = arith.addf %259, %260 : vector<8x384xf32>
    %c0_123 = arith.constant 0 : index
    %c0_124 = arith.constant 0 : index
    %c384_125 = arith.constant 384 : index
    %262 = vector.load %arg10[%c0_123, %c0_124, %c384_125] : memref<1x8x768xf32, #tpu.memory_space<vmem>>, vector<1x8x384xf32>
    %263 = vector.shape_cast %262 : vector<1x8x384xf32> to vector<8x384xf32>
    %264 = vector.shape_cast %261 : vector<8x384xf32> to vector<1x8x384xf32>
    tpu.vector_store %arg10[%c0_123, %c0_124, %c384_125], %264 {strides = array<i32>} : memref<1x8x768xf32, #tpu.memory_space<vmem>>, vector<1x8x384xf32>,
    return
  }
  func.func @transform_0(%arg0: i32) -> (i32, i32, i32) {
    %c0_i32 = arith.constant 0 : i32
    %c0_i32_0 = arith.constant 0 : i32
    %c0_i32_1 = arith.constant 0 : i32
    return %arg0, %c0_i32, %c0_i32_0 : i32, i32, i32
  }
  func.func @transform_1(%arg0: i32) -> (i32, i32) {
    %c0_i32 = arith.constant 0 : i32
    %c0_i32_0 = arith.constant 0 : i32
    %c0_i32_1 = arith.constant 0 : i32
    return %c0_i32, %c0_i32_0 : i32, i32
  }
  func.func @transform_2(%arg0: i32) -> (i32, i32) {
    %c0_i32 = arith.constant 0 : i32
    %c0_i32_0 = arith.constant 0 : i32
    %c0_i32_1 = arith.constant 0 : i32
    return %c0_i32, %c0_i32_0 : i32, i32
  }
  func.func @transform_3(%arg0: i32) -> (i32, i32) {
    %c0_i32 = arith.constant 0 : i32
    %c0_i32_0 = arith.constant 0 : i32
    %c0_i32_1 = arith.constant 0 : i32
    return %c0_i32, %c0_i32_0 : i32, i32
  }
  func.func @transform_4(%arg0: i32) -> (i32, i32) {
    %c0_i32 = arith.constant 0 : i32
    %c0_i32_0 = arith.constant 0 : i32
    %c0_i32_1 = arith.constant 0 : i32
    return %c0_i32, %c0_i32_0 : i32, i32
  }
  func.func @transform_5(%arg0: i32) -> (i32, i32) {
    %c0_i32 = arith.constant 0 : i32
    %c0_i32_0 = arith.constant 0 : i32
    %c0_i32_1 = arith.constant 0 : i32
    return %c0_i32, %c0_i32_0 : i32, i32
  }
  func.func @transform_6(%arg0: i32) -> (i32, i32) {
    %c0_i32 = arith.constant 0 : i32
    %c0_i32_0 = arith.constant 0 : i32
    %c0_i32_1 = arith.constant 0 : i32
    return %c0_i32, %c0_i32_0 : i32, i32
  }
  func.func @transform_7(%arg0: i32) -> (i32, i32) {
    %c0_i32 = arith.constant 0 : i32
    %c0_i32_0 = arith.constant 0 : i32
    %c0_i32_1 = arith.constant 0 : i32
    return %c0_i32, %c0_i32_0 : i32, i32
  }
  func.func @transform_8(%arg0: i32) -> (i32, i32) {
    %c0_i32 = arith.constant 0 : i32
    %c0_i32_0 = arith.constant 0 : i32
    %c0_i32_1 = arith.constant 0 : i32
    return %c0_i32, %c0_i32_0 : i32, i32
  }
  func.func @transform_9(%arg0: i32) -> (i32, i32, i32) {
    %c0_i32 = arith.constant 0 : i32
    %c0_i32_0 = arith.constant 0 : i32
    %c0_i32_1 = arith.constant 0 : i32
    return %arg0, %c0_i32, %c0_i32_0 : i32, i32, i32
  }
}

</mosaic_0001>

<llo_original>
// kernel: down_block_forward.1
$region0: #{down_block_forward.1}
  #allocation0 [shape = 'u32[]', space=smem, size = 0x4, offset = 0x4, fixed_abs, tag = 'smem constant byte address 0x4 - core index']
  #allocation1 [shape = 'u32[72,128]{1,0:T(1,128)}', space=vmem, size = 0x9000, scoped, tag = 'internal scratch']
  #allocation2 [shape = 'bf16[8,896]{1,0:T(8,128)(2,1)}', space=vmem, size = 0x3800, scoped, tag = 'scratch operand']
  %s0 = inlined_call_operand.vmem [shape: bf16[1,4,896], index: 0, kind: input, shape index: {}]
  %s1 = inlined_call_operand.vmem [shape: bf16[8,36], index: 1, kind: input, shape index: {}]
  %s2 = inlined_call_operand.vmem [shape: bf16[8,72], index: 2, kind: input, shape index: {}]
  %s3 = inlined_call_operand.vmem [shape: f32[1,768], index: 3, kind: input, shape index: {}]
  %s4 = inlined_call_operand.vmem [shape: f32[1,768], index: 4, kind: input, shape index: {}]
  %s5 = inlined_call_operand.vmem [shape: f32[8,1], index: 5, kind: input, shape index: {}]
  %s6 = inlined_call_operand.vmem [shape: f32[8,1], index: 6, kind: input, shape index: {}]
  %s7 = inlined_call_operand.vmem [shape: f32[8,1], index: 7, kind: input, shape index: {}]
  %s8 = inlined_call_operand.vmem [shape: f32[8,1], index: 8, kind: input, shape index: {}]
  %s9 = inlined_call_operand.vmem [shape: f32[1,8,768], index: 9, kind: output, shape index: {}]
  %s10 = sld [smem:[#allocation0]]
  $region46: #{down_block_forward.1} parent=0
    _
  %s12 = ssub.s32 1, %s10
  %s13 = scalar_select 0, %s12, %s10
  // Predicated region
  $region2: #{down_block_forward.1} parent=0 // pred_check
    _
  $region3: #{down_block_forward.1} parent=0 // pred_check_branch
    %15 = sbr.rel (0) target = $region5
  $region4: #{down_block_forward.1} parent=0 // pred_region
    _
  $region5: #{down_block_forward.1} parent=0 // pred_fallthru
    _
  // Predicated region
  $region6: #{down_block_forward.1} parent=0 // pred_check
    _
  $region7: #{down_block_forward.1} parent=0 // pred_check_branch
    %17 = sbr.rel (0) target = $region9
  $region8: #{down_block_forward.1} parent=0 // pred_region
    _
  $region9: #{down_block_forward.1} parent=0 // pred_fallthru
    _
  // Predicated region
  $region10: #{down_block_forward.1} parent=0 // pred_check
    _
  $region11: #{down_block_forward.1} parent=0 // pred_check_branch
    %19 = sbr.rel (0) target = $region13
  $region12: #{down_block_forward.1} parent=0 // pred_region
    _
  $region13: #{down_block_forward.1} parent=0 // pred_fallthru
    _
  // Predicated region
  $region14: #{down_block_forward.1} parent=0 // pred_check
    _
  $region15: #{down_block_forward.1} parent=0 // pred_check_branch
    %21 = sbr.rel (0) target = $region17
  $region16: #{down_block_forward.1} parent=0 // pred_region
    _
  $region17: #{down_block_forward.1} parent=0 // pred_fallthru
    _
  // Predicated region
  $region18: #{down_block_forward.1} parent=0 // pred_check
    _
  $region19: #{down_block_forward.1} parent=0 // pred_check_branch
    %23 = sbr.rel (0) target = $region21
  $region20: #{down_block_forward.1} parent=0 // pred_region
    _
  $region21: #{down_block_forward.1} parent=0 // pred_fallthru
    _
  // Predicated region
  $region22: #{down_block_forward.1} parent=0 // pred_check
    _
  $region23: #{down_block_forward.1} parent=0 // pred_check_branch
    %25 = sbr.rel (0) target = $region25
  $region24: #{down_block_forward.1} parent=0 // pred_region
    _
  $region25: #{down_block_forward.1} parent=0 // pred_fallthru
    _
  // Predicated region
  $region26: #{down_block_forward.1} parent=0 // pred_check
    _
  $region27: #{down_block_forward.1} parent=0 // pred_check_branch
    %27 = sbr.rel (0) target = $region29
  $region28: #{down_block_forward.1} parent=0 // pred_region
    _
  $region29: #{down_block_forward.1} parent=0 // pred_fallthru
    _
  // Predicated region
  $region30: #{down_block_forward.1} parent=0 // pred_check
    _
  $region31: #{down_block_forward.1} parent=0 // pred_check_branch
    %29 = sbr.rel (0) target = $region33
  $region32: #{down_block_forward.1} parent=0 // pred_region
    _
  $region33: #{down_block_forward.1} parent=0 // pred_fallthru
    _
  // Predicated region
  $region34: #{down_block_forward.1} parent=0 // pred_check
    _
  $region35: #{down_block_forward.1} parent=0 // pred_check_branch
    %31 = sbr.rel (0) target = $region37
  $region36: #{down_block_forward.1} parent=0 // pred_region
    _
  $region37: #{down_block_forward.1} parent=0 // pred_fallthru
    _
  %33 = vst [vmem:[#allocation2] sm:$0xff] 0
  %34 = vst [vmem:[#allocation2 + $0x8] sm:$0xff] 0
  %35 = vst [vmem:[#allocation2 + $0x10] sm:$0xff] 0
  %36 = vst [vmem:[#allocation2 + $0x18] sm:$0xf] 0
  %v37 = vld [vmem:[%s0] sm:$0xff]
  %v38 = vld [vmem:[%s0 + $0x8] sm:$0xf]
  %v39 = vld [vmem:[%s0] sm:$0xff]
  %v40 = vld [vmem:[%s0 + $0x8] sm:$0x3f]
  %42 = vst [vmem:[#allocation1] ss:$4 sm:$0xff] %v37
  %s44 = scalar_lea.vmem [#allocation1], 32
  %45 = vst [vmem:[%s44] ss:$4 sm:$0xff] %v38
  %v46 = vld.sshfl [vmem:[#allocation1] sm:$0xff pattern:$0x73625140]
  %v47 = vld.sshfl [vmem:[#allocation1 + $0x8] sm:$0xff pattern:$0x73625140]
  %v48 = vld.sshfl [vmem:[#allocation1 + $0x10] sm:$0xff pattern:$0x73625140]
  %v49 = vld.sshfl [vmem:[#allocation1 + $0x18] sm:$0xff pattern:$0x73625140]
  %v50 = vld.sshfl [vmem:[#allocation1 + $0x20] sm:$0xff pattern:$0x73625140]
  %v51 = vld.sshfl [vmem:[#allocation1 + $0x28] sm:$0xff pattern:$0x73625140]
  %s53 = scalar_lea.vmem [#allocation1], 1
  %54 = vst [vmem:[%s53] ss:$4 sm:$0xff] %v39
  %s56 = scalar_lea.vmem [#allocation1], 33
  %57 = vst [vmem:[%s56] ss:$4 sm:$0xff] %v40
  %v58 = vld.sshfl [vmem:[#allocation1] sm:$0xff pattern:$0x73625140]
  %v60 = vld.sshfl [vmem:[#allocation1 + $0x8] sm:$0xff pattern:$0x73625140]
  %v62 = vld.sshfl [vmem:[#allocation1 + $0x10] sm:$0xff pattern:$0x73625140]
  %v64 = vld.sshfl [vmem:[#allocation1 + $0x18] sm:$0xff pattern:$0x73625140]
  %v66 = vld.sshfl [vmem:[#allocation1 + $0x20] sm:$0xff pattern:$0x73625140]
  %v68 = vld.sshfl [vmem:[#allocation1 + $0x28] sm:$0xff pattern:$0x73625140]
  %v70 = vld.sshfl [vmem:[#allocation1 + $0x30] sm:$0xff pattern:$0x73625140]
  %72 = vrot.lane.b32.xlu0 %v58, 127
  %v73 = vpop.permute.xlu0 %72
  %74 = vrot.lane.b32.xlu0 %v60, 127
  %v75 = vpop.permute.xlu0 %74
  %76 = vrot.lane.b32.xlu0 %v62, 127
  %v77 = vpop.permute.xlu0 %76
  %78 = vrot.lane.b32.xlu0 %v64, 127
  %v79 = vpop.permute.xlu0 %78
  %80 = vrot.lane.b32.xlu0 %v66, 127
  %v81 = vpop.permute.xlu0 %80
  %82 = vrot.lane.b32.xlu0 %v68, 127
  %v83 = vpop.permute.xlu0 %82
  %84 = vrot.lane.b32.xlu0 %v70, 127
  %v85 = vpop.permute.xlu0 %84
  %vm86 = vcmask 1039360
  %v87 = vsel %vm86, %v73, %v75
  %v88 = vsel %vm86, %v75, %v77
  %v89 = vsel %vm86, %v77, %v79
  %v90 = vsel %vm86, %v79, %v81
  %v91 = vsel %vm86, %v81, %v83
  %v92 = vsel %vm86, %v83, %v85
  %s93 = scalar_lea.vmem [#allocation1], 2
  %94 = vst [vmem:[%s93] ss:$4 sm:$0xff] %v39
  %s95 = scalar_lea.vmem [#allocation1], 34
  %96 = vst [vmem:[%s95] ss:$4 sm:$0xff] %v40
  %v97 = vld.sshfl [vmem:[#allocation1] sm:$0xff pattern:$0x73625140]
  %v99 = vld.sshfl [vmem:[#allocation1 + $0x8] sm:$0xff pattern:$0x73625140]
  %v101 = vld.sshfl [vmem:[#allocation1 + $0x10] sm:$0xff pattern:$0x73625140]
  %v103 = vld.sshfl [vmem:[#allocation1 + $0x18] sm:$0xff pattern:$0x73625140]
  %v105 = vld.sshfl [vmem:[#allocation1 + $0x20] sm:$0xff pattern:$0x73625140]
  %v107 = vld.sshfl [vmem:[#allocation1 + $0x28] sm:$0xff pattern:$0x73625140]
  %v109 = vld.sshfl [vmem:[#allocation1 + $0x30] sm:$0xff pattern:$0x73625140]
  %111 = vrot.lane.b32.xlu0 %v97, 126
  %v112 = vpop.permute.xlu0 %111
  %113 = vrot.lane.b32.xlu0 %v99, 126
  %v114 = vpop.permute.xlu0 %113
  %115 = vrot.lane.b32.xlu0 %v101, 126
  %v116 = vpop.permute.xlu0 %115
  %117 = vrot.lane.b32.xlu0 %v103, 126
  %v118 = vpop.permute.xlu0 %117
  %119 = vrot.lane.b32.xlu0 %v105, 126
  %v120 = vpop.permute.xlu0 %119
  %121 = vrot.lane.b32.xlu0 %v107, 126
  %v122 = vpop.permute.xlu0 %121
  %123 = vrot.lane.b32.xlu0 %v109, 126
  %v124 = vpop.permute.xlu0 %123
  %vm125 = vcmask 1031168
  %v126 = vsel %vm125, %v112, %v114
  %v127 = vsel %vm125, %v114, %v116
  %v128 = vsel %vm125, %v116, %v118
  %v129 = vsel %vm125, %v118, %v120
  %v130 = vsel %vm125, %v120, %v122
  %v131 = vsel %vm125, %v122, %v124
  %s132 = scalar_lea.vmem [#allocation1], 3
  %133 = vst [vmem:[%s132] ss:$4 sm:$0xff] %v39
  %s134 = scalar_lea.vmem [#allocation1], 35
  %135 = vst [vmem:[%s134] ss:$4 sm:$0xff] %v40
  %v136 = vld.sshfl [vmem:[#allocation1] sm:$0xff pattern:$0x73625140]
  %v138 = vld.sshfl [vmem:[#allocation1 + $0x8] sm:$0xff pattern:$0x73625140]
  %v140 = vld.sshfl [vmem:[#allocation1 + $0x10] sm:$0xff pattern:$0x73625140]
  %v142 = vld.sshfl [vmem:[#allocation1 + $0x18] sm:$0xff pattern:$0x73625140]
  %v144 = vld.sshfl [vmem:[#allocation1 + $0x20] sm:$0xff pattern:$0x73625140]
  %v146 = vld.sshfl [vmem:[#allocation1 + $0x28] sm:$0xff pattern:$0x73625140]
  %v148 = vld.sshfl [vmem:[#allocation1 + $0x30] sm:$0xff pattern:$0x73625140]
  %150 = vrot.lane.b32.xlu0 %v136, 110
  %v151 = vpop.permute.xlu0 %150
  %152 = vrot.lane.b32.xlu0 %v138, 110
  %v153 = vpop.permute.xlu0 %152
  %154 = vrot.lane.b32.xlu0 %v140, 110
  %v155 = vpop.permute.xlu0 %154
  %156 = vrot.lane.b32.xlu0 %v142, 110
  %v157 = vpop.permute.xlu0 %156
  %158 = vrot.lane.b32.xlu0 %v144, 110
  %v159 = vpop.permute.xlu0 %158
  %160 = vrot.lane.b32.xlu0 %v146, 110
  %v161 = vpop.permute.xlu0 %160
  %162 = vrot.lane.b32.xlu0 %v148, 110
  %v163 = vpop.permute.xlu0 %162
  %vm164 = vcmask 900096
  %v165 = vsel %vm164, %v151, %v153
  %v166 = vsel %vm164, %v153, %v155
  %v167 = vsel %vm164, %v155, %v157
  %v168 = vsel %vm164, %v157, %v159
  %v169 = vsel %vm164, %v159, %v161
  %v170 = vsel %vm164, %v161, %v163
  %171 = vst [vmem:[#allocation1] ss:$4 sm:$0xff] %v39
  %s172 = scalar_lea.vmem [#allocation1], 32
  %173 = vst [vmem:[%s172] ss:$4 sm:$0xff] %v40
  %v174 = vld.sshfl [vmem:[#allocation1] sm:$0xff pattern:$0x73625140]
  %v176 = vld.sshfl [vmem:[#allocation1 + $0x8] sm:$0xff pattern:$0x73625140]
  %v178 = vld.sshfl [vmem:[#allocation1 + $0x10] sm:$0xff pattern:$0x73625140]
  %v180 = vld.sshfl [vmem:[#allocation1 + $0x18] sm:$0xff pattern:$0x73625140]
  %v182 = vld.sshfl [vmem:[#allocation1 + $0x20] sm:$0xff pattern:$0x73625140]
  %v184 = vld.sshfl [vmem:[#allocation1 + $0x28] sm:$0xff pattern:$0x73625140]
  %v186 = vld.sshfl [vmem:[#allocation1 + $0x30] sm:$0xff pattern:$0x73625140]
  %188 = vrot.lane.b32.xlu0 %v174, 109
  %v189 = vpop.permute.xlu0 %188
  %190 = vrot.lane.b32.xlu0 %v176, 109
  %v191 = vpop.permute.xlu0 %190
  %192 = vrot.lane.b32.xlu0 %v178, 109
  %v193 = vpop.permute.xlu0 %192
  %194 = vrot.lane.b32.xlu0 %v180, 109
  %v195 = vpop.permute.xlu0 %194
  %196 = vrot.lane.b32.xlu0 %v182, 109
  %v197 = vpop.permute.xlu0 %196
  %198 = vrot.lane.b32.xlu0 %v184, 109
  %v199 = vpop.permute.xlu0 %198
  %200 = vrot.lane.b32.xlu0 %v186, 109
  %v201 = vpop.permute.xlu0 %200
  %vm202 = vcmask 891904
  %v203 = vsel %vm202, %v189, %v191
  %v204 = vsel %vm202, %v191, %v193
  %v205 = vsel %vm202, %v193, %v195
  %v206 = vsel %vm202, %v195, %v197
  %v207 = vsel %vm202, %v197, %v199
  %v208 = vsel %vm202, %v199, %v201
  %s209 = scalar_lea.vmem [#allocation1], 1
  %210 = vst [vmem:[%s209] ss:$4 sm:$0xff] %v39
  %s211 = scalar_lea.vmem [#allocation1], 33
  %212 = vst [vmem:[%s211] ss:$4 sm:$0xff] %v40
  %v213 = vld.sshfl [vmem:[#allocation1] sm:$0xff pattern:$0x73625140]
  %v215 = vld.sshfl [vmem:[#allocation1 + $0x8] sm:$0xff pattern:$0x73625140]
  %v217 = vld.sshfl [vmem:[#allocation1 + $0x10] sm:$0xff pattern:$0x73625140]
  %v219 = vld.sshfl [vmem:[#allocation1 + $0x18] sm:$0xff pattern:$0x73625140]
  %v221 = vld.sshfl [vmem:[#allocation1 + $0x20] sm:$0xff pattern:$0x73625140]
  %v223 = vld.sshfl [vmem:[#allocation1 + $0x28] sm:$0xff pattern:$0x73625140]
  %v225 = vld.sshfl [vmem:[#allocation1 + $0x30] sm:$0xff pattern:$0x73625140]
  %227 = vrot.lane.b32.xlu0 %v213, 108
  %v228 = vpop.permute.xlu0 %227
  %229 = vrot.lane.b32.xlu0 %v215, 108
  %v230 = vpop.permute.xlu0 %229
  %231 = vrot.lane.b32.xlu0 %v217, 108
  %v232 = vpop.permute.xlu0 %231
  %233 = vrot.lane.b32.xlu0 %v219, 108
  %v234 = vpop.permute.xlu0 %233
  %235 = vrot.lane.b32.xlu0 %v221, 108
  %v236 = vpop.permute.xlu0 %235
  %237 = vrot.lane.b32.xlu0 %v223, 108
  %v238 = vpop.permute.xlu0 %237
  %239 = vrot.lane.b32.xlu0 %v225, 108
  %v240 = vpop.permute.xlu0 %239
  %vm241 = vcmask 883712
  %v242 = vsel %vm241, %v228, %v230
  %v243 = vsel %vm241, %v230, %v232
  %v244 = vsel %vm241, %v232, %v234
  %v245 = vsel %vm241, %v234, %v236
  %v246 = vsel %vm241, %v236, %v238
  %v247 = vsel %vm241, %v238, %v240
  %s248 = scalar_lea.vmem [#allocation1], 2
  %249 = vst [vmem:[%s248] ss:$4 sm:$0xff] %v39
  %s250 = scalar_lea.vmem [#allocation1], 34
  %251 = vst [vmem:[%s250] ss:$4 sm:$0xff] %v40
  %v252 = vld.sshfl [vmem:[#allocation1] sm:$0xff pattern:$0x73625140]
  %v254 = vld.sshfl [vmem:[#allocation1 + $0x8] sm:$0xff pattern:$0x73625140]
  %v256 = vld.sshfl [vmem:[#allocation1 + $0x10] sm:$0xff pattern:$0x73625140]
  %v258 = vld.sshfl [vmem:[#allocation1 + $0x18] sm:$0xff pattern:$0x73625140]
  %v260 = vld.sshfl [vmem:[#allocation1 + $0x20] sm:$0xff pattern:$0x73625140]
  %v262 = vld.sshfl [vmem:[#allocation1 + $0x28] sm:$0xff pattern:$0x73625140]
  %v264 = vld.sshfl [vmem:[#allocation1 + $0x30] sm:$0xff pattern:$0x73625140]
  %266 = vrot.lane.b32.xlu0 %v252, 92
  %v267 = vpop.permute.xlu0 %266
  %268 = vrot.lane.b32.xlu0 %v254, 92
  %v269 = vpop.permute.xlu0 %268
  %270 = vrot.lane.b32.xlu0 %v256, 92
  %v271 = vpop.permute.xlu0 %270
  %272 = vrot.lane.b32.xlu0 %v258, 92
  %v273 = vpop.permute.xlu0 %272
  %274 = vrot.lane.b32.xlu0 %v260, 92
  %v275 = vpop.permute.xlu0 %274
  %276 = vrot.lane.b32.xlu0 %v262, 92
  %v277 = vpop.permute.xlu0 %276
  %278 = vrot.lane.b32.xlu0 %v264, 92
  %v279 = vpop.permute.xlu0 %278
  %vm280 = vcmask 752640
  %v281 = vsel %vm280, %v267, %v269
  %v282 = vsel %vm280, %v269, %v271
  %v283 = vsel %vm280, %v271, %v273
  %v284 = vsel %vm280, %v273, %v275
  %v285 = vsel %vm280, %v275, %v277
  %v286 = vsel %vm280, %v277, %v279
  %s287 = scalar_lea.vmem [#allocation1], 3
  %288 = vst [vmem:[%s287] ss:$4 sm:$0xff] %v39
  %s289 = scalar_lea.vmem [#allocation1], 35
  %290 = vst [vmem:[%s289] ss:$4 sm:$0xff] %v40
  %v291 = vld.sshfl [vmem:[#allocation1] sm:$0xff pattern:$0x73625140]
  %v293 = vld.sshfl [vmem:[#allocation1 + $0x8] sm:$0xff pattern:$0x73625140]
  %v295 = vld.sshfl [vmem:[#allocation1 + $0x10] sm:$0xff pattern:$0x73625140]
  %v297 = vld.sshfl [vmem:[#allocation1 + $0x18] sm:$0xff pattern:$0x73625140]
  %v299 = vld.sshfl [vmem:[#allocation1 + $0x20] sm:$0xff pattern:$0x73625140]
  %v301 = vld.sshfl [vmem:[#allocation1 + $0x28] sm:$0xff pattern:$0x73625140]
  %v303 = vld.sshfl [vmem:[#allocation1 + $0x30] sm:$0xff pattern:$0x73625140]
  %305 = vrot.lane.b32.xlu0 %v291, 91
  %v306 = vpop.permute.xlu0 %305
  %307 = vrot.lane.b32.xlu0 %v293, 91
  %v308 = vpop.permute.xlu0 %307
  %309 = vrot.lane.b32.xlu0 %v295, 91
  %v310 = vpop.permute.xlu0 %309
  %311 = vrot.lane.b32.xlu0 %v297, 91
  %v312 = vpop.permute.xlu0 %311
  %313 = vrot.lane.b32.xlu0 %v299, 91
  %v314 = vpop.permute.xlu0 %313
  %315 = vrot.lane.b32.xlu0 %v301, 91
  %v316 = vpop.permute.xlu0 %315
  %317 = vrot.lane.b32.xlu0 %v303, 91
  %v318 = vpop.permute.xlu0 %317
  %vm319 = vcmask 744448
  %v320 = vsel %vm319, %v306, %v308
  %v321 = vsel %vm319, %v308, %v310
  %v322 = vsel %vm319, %v310, %v312
  %v323 = vsel %vm319, %v312, %v314
  %v324 = vsel %vm319, %v314, %v316
  %v325 = vsel %vm319, %v316, %v318
  %326 = vst [vmem:[#allocation1] ss:$4 sm:$0xff] %v39
  %s327 = scalar_lea.vmem [#allocation1], 32
  %328 = vst [vmem:[%s327] ss:$4 sm:$0xff] %v40
  %v329 = vld.sshfl [vmem:[#allocation1] sm:$0xff pattern:$0x73625140]
  %v331 = vld.sshfl [vmem:[#allocation1 + $0x8] sm:$0xff pattern:$0x73625140]
  %v333 = vld.sshfl [vmem:[#allocation1 + $0x10] sm:$0xff pattern:$0x73625140]
  %v335 = vld.sshfl [vmem:[#allocation1 + $0x18] sm:$0xff pattern:$0x73625140]
  %v337 = vld.sshfl [vmem:[#allocation1 + $0x20] sm:$0xff pattern:$0x73625140]
  %v339 = vld.sshfl [vmem:[#allocation1 + $0x28] sm:$0xff pattern:$0x73625140]
  %v341 = vld.sshfl [vmem:[#allocation1 + $0x30] sm:$0xff pattern:$0x73625140]
  %343 = vrot.lane.b32.xlu0 %v329, 90
  %v344 = vpop.permute.xlu0 %343
  %345 = vrot.lane.b32.xlu0 %v331, 90
  %v346 = vpop.permute.xlu0 %345
  %347 = vrot.lane.b32.xlu0 %v333, 90
  %v348 = vpop.permute.xlu0 %347
  %349 = vrot.lane.b32.xlu0 %v335, 90
  %v350 = vpop.permute.xlu0 %349
  %351 = vrot.lane.b32.xlu0 %v337, 90
  %v352 = vpop.permute.xlu0 %351
  %353 = vrot.lane.b32.xlu0 %v339, 90
  %v354 = vpop.permute.xlu0 %353
  %355 = vrot.lane.b32.xlu0 %v341, 90
  %v356 = vpop.permute.xlu0 %355
  %vm357 = vcmask 736256
  %v358 = vsel %vm357, %v344, %v346
  %v359 = vsel %vm357, %v346, %v348
  %v360 = vsel %vm357, %v348, %v350
  %v361 = vsel %vm357, %v350, %v352
  %v362 = vsel %vm357, %v352, %v354
  %v363 = vsel %vm357, %v354, %v356
  %vm364 = vcmask 1041408
  %v366 = vsel %vm364, %v46, %v87
  %v368 = vsel %vm364, %v47, %v88
  %v370 = vsel %vm364, %v48, %v89
  %v372 = vsel %vm364, %v49, %v90
  %v374 = vsel %vm364, %v50, %v91
  %v376 = vsel %vm364, %v51, %v92
  %vm377 = vcmask 1043456
  %v379 = vsel %vm377, %v366, %v126
  %v381 = vsel %vm377, %v368, %v127
  %v383 = vsel %vm377, %v370, %v128
  %v385 = vsel %vm377, %v372, %v129
  %v387 = vsel %vm377, %v374, %v130
  %v389 = vsel %vm377, %v376, %v131
  %vm390 = vcmask 1045504
  %v392 = vsel %vm390, %v379, %v165
  %v395 = vsel %vm390, %v381, %v166
  %v398 = vsel %vm390, %v383, %v167
  %v401 = vsel %vm390, %v385, %v168
  %v404 = vsel %vm390, %v387, %v169
  %v407 = vsel %vm390, %v389, %v170
  %v411 = vsel %vm364, %v203, %v242
  %v414 = vsel %vm364, %v204, %v243
  %v417 = vsel %vm364, %v205, %v244
  %v420 = vsel %vm364, %v206, %v245
  %v423 = vsel %vm364, %v207, %v246
  %v426 = vsel %vm364, %v208, %v247
  %v428 = vsel %vm377, %v411, %v281
  %v430 = vsel %vm377, %v414, %v282
  %v432 = vsel %vm377, %v417, %v283
  %v434 = vsel %vm377, %v420, %v284
  %v436 = vsel %vm377, %v423, %v285
  %v438 = vsel %vm377, %v426, %v286
  %v440 = vsel %vm390, %v428, %v320
  %v443 = vsel %vm390, %v430, %v321
  %v446 = vsel %vm390, %v432, %v322
  %v449 = vsel %vm390, %v434, %v323
  %v452 = vsel %vm390, %v436, %v324
  %v455 = vsel %vm390, %v438, %v325
  %v457 = vld [vmem:[%s1] sm:$0xf]
  %vm458 = vcmask 293888
  %v460 = vsel %vm458, %v457, 0
  %v463 = vsel %vm364, %v358, 0
  %v466 = vsel %vm364, %v359, 0
  %v469 = vsel %vm364, %v360, 0
  %v472 = vsel %vm364, %v361, 0
  %v475 = vsel %vm364, %v362, 0
  %v478 = vsel %vm364, %v363, 0
  %480 = vmatpush.bf16.msra.mxu0 0
  %481 = vmatpush.bf16.msra.mxu0 0
  %482 = vmatpush.bf16.msra.mxu0 0
  %483 = vmatpush.bf16.msra.mxu0 0
  %484 = vmatpush.bf16.msra.mxu0 0
  %485 = vmatpush.bf16.msra.mxu0 %v463
  %486 = vmatpush.bf16.msra.mxu0 %v440
  %487 = vmatpush.bf16.msra.mxu0 %v392
  %488 = vmatmul.bf16.gmra.mxu0 %v460
  %v489 = vpop.f32.mrf.mxu0
  %v490 = vadd.f32 0.0, %v489
  %v491 = vpop.f32.mrf.mxu0
  %492 = vdwg.mxu0
  %493 = vmatpush.bf16.msra.mxu0 0
  %494 = vmatpush.bf16.msra.mxu0 0
  %495 = vmatpush.bf16.msra.mxu0 0
  %496 = vmatpush.bf16.msra.mxu0 0
  %497 = vmatpush.bf16.msra.mxu0 0
  %498 = vmatpush.bf16.msra.mxu0 %v466
  %499 = vmatpush.bf16.msra.mxu0 %v443
  %500 = vmatpush.bf16.msra.mxu0 %v395
  %501 = vmatmul.bf16.gmra.mxu0 %v460
  %v502 = vpop.f32.mrf.mxu0
  %v503 = vadd.f32 0.0, %v502
  %v504 = vpop.f32.mrf.mxu0
  %505 = vdwg.mxu0
  %506 = vmatpush.bf16.msra.mxu0 0
  %507 = vmatpush.bf16.msra.mxu0 0
  %508 = vmatpush.bf16.msra.mxu0 0
  %509 = vmatpush.bf16.msra.mxu0 0
  %510 = vmatpush.bf16.msra.mxu0 0
  %511 = vmatpush.bf16.msra.mxu0 %v469
  %512 = vmatpush.bf16.msra.mxu0 %v446
  %513 = vmatpush.bf16.msra.mxu0 %v398
  %514 = vmatmul.bf16.gmra.mxu0 %v460
  %v515 = vpop.f32.mrf.mxu0
  %v516 = vadd.f32 0.0, %v515
  %v517 = vpop.f32.mrf.mxu0
  %518 = vdwg.mxu0
  %519 = vmatpush.bf16.msra.mxu0 0
  %520 = vmatpush.bf16.msra.mxu0 0
  %521 = vmatpush.bf16.msra.mxu0 0
  %522 = vmatpush.bf16.msra.mxu0 0
  %523 = vmatpush.bf16.msra.mxu0 0
  %524 = vmatpush.bf16.msra.mxu0 %v472
  %525 = vmatpush.bf16.msra.mxu0 %v449
  %526 = vmatpush.bf16.msra.mxu0 %v401
  %527 = vmatmul.bf16.gmra.mxu0 %v460
  %v528 = vpop.f32.mrf.mxu0
  %v529 = vadd.f32 0.0, %v528
  %v530 = vpop.f32.mrf.mxu0
  %531 = vdwg.mxu0
  %532 = vmatpush.bf16.msra.mxu0 0
  %533 = vmatpush.bf16.msra.mxu0 0
  %534 = vmatpush.bf16.msra.mxu0 0
  %535 = vmatpush.bf16.msra.mxu0 0
  %536 = vmatpush.bf16.msra.mxu0 0
  %537 = vmatpush.bf16.msra.mxu0 %v475
  %538 = vmatpush.bf16.msra.mxu0 %v452
  %539 = vmatpush.bf16.msra.mxu0 %v404
  %540 = vmatmul.bf16.gmra.mxu0 %v460
  %v541 = vpop.f32.mrf.mxu0
  %v542 = vadd.f32 0.0, %v541
  %v543 = vpop.f32.mrf.mxu0
  %544 = vdwg.mxu0
  %545 = vmatpush.bf16.msra.mxu0 0
  %546 = vmatpush.bf16.msra.mxu0 0
  %547 = vmatpush.bf16.msra.mxu0 0
  %548 = vmatpush.bf16.msra.mxu0 0
  %549 = vmatpush.bf16.msra.mxu0 0
  %550 = vmatpush.bf16.msra.mxu0 %v478
  %551 = vmatpush.bf16.msra.mxu0 %v455
  %552 = vmatpush.bf16.msra.mxu0 %v407
  %553 = vmatmul.bf16.gmra.mxu0 %v460
  %v554 = vpop.f32.mrf.mxu0
  %v555 = vadd.f32 0.0, %v554
  %v556 = vpop.f32.mrf.mxu0
  %557 = vdwg.mxu0
  %v558 = vld [vmem:[%s5] sm:$0xff]
  %v559 = vld [vmem:[%s6] sm:$0xff]
  %v560 = vld [vmem:[%s3] sm:$0x7]
  %v562 = vperm.slane %v560, 0
  %v563 = vperm.slane %v560, 1
  %v564 = vperm.slane %v560, 2
  %v568 = vmul.f32 %v490, %v562
  %v569 = vmul.f32 %v503, %v563
  %v570 = vmul.f32 %v516, %v564
  %v571 = vrot.slane %v568, 4
  %v572 = vadd.f32 %v568, %v571
  %v573 = vrot.slane %v572, 2
  %v574 = vadd.f32 %v572, %v573
  %v575 = vrot.slane %v574, 1
  %v576 = vadd.f32 %v574, %v575
  %v577 = vrot.slane %v569, 4
  %v578 = vadd.f32 %v569, %v577
  %v579 = vrot.slane %v578, 2
  %v580 = vadd.f32 %v578, %v579
  %v581 = vrot.slane %v580, 1
  %v582 = vadd.f32 %v580, %v581
  %v583 = vrot.slane %v570, 4
  %v584 = vadd.f32 %v570, %v583
  %v585 = vrot.slane %v584, 2
  %v586 = vadd.f32 %v584, %v585
  %v587 = vrot.slane %v586, 1
  %v588 = vadd.f32 %v586, %v587
  %v589 = vmul.f32 %v568, %v490
  %v590 = vmul.f32 %v569, %v503
  %v591 = vmul.f32 %v570, %v516
  %v592 = vrot.slane %v589, 4
  %v593 = vadd.f32 %v589, %v592
  %v594 = vrot.slane %v593, 2
  %v595 = vadd.f32 %v593, %v594
  %v596 = vrot.slane %v595, 1
  %v597 = vadd.f32 %v595, %v596
  %v598 = vrot.slane %v590, 4
  %v599 = vadd.f32 %v590, %v598
  %v600 = vrot.slane %v599, 2
  %v601 = vadd.f32 %v599, %v600
  %v602 = vrot.slane %v601, 1
  %v603 = vadd.f32 %v601, %v602
  %v604 = vrot.slane %v591, 4
  %v605 = vadd.f32 %v591, %v604
  %v606 = vrot.slane %v605, 2
  %v607 = vadd.f32 %v605, %v606
  %v608 = vrot.slane %v607, 1
  %v609 = vadd.f32 %v607, %v608
  %vm610 = vcmask 1040384
  %v611 = vsel %vm610, %v576, %v597
  %v612 = vsel %vm610, %v582, %v603
  %v613 = vsel %vm610, %v588, %v609
  %v614 = vsel %vm364, %v611, 0.0
  %v615 = vsel %vm364, %v612, 0.0
  %v616 = vadd.f32 %v614, %v615
  %v617 = vsel %vm364, %v613, 0.0
  %v618 = vadd.f32 %v616, %v617
  %619 = vadd.xlane.f32.xlu0 %v618
  %v620 = vpop.xlane.xlu0 %619
  %v621 = vrcp.pop 2048.0
  %v622 = vmul.f32 2048.0, %v621
  %v623 = vsub.f32 1.0, %v622
  %v624 = vmul.f32 %v621, %v623
  %v625 = vadd.f32 %v621, %v624
  %vm626 = vweird.f32 %v621
  %v627 = vsel %vm626, %v621, %v625
  %v628 = vmul.f32 %v620, %v627
  %v629 = vmul.f32 %v628, %v628
  %v631 = vrot.slane %v629, 7
  %v633 = vsub.f32 %v628, %v631
  %v634 = vmax.f32 %v633, 0.0
  %v635 = vperm.slane %v628, 0
  %v636 = vsub.f32 %v490, %v635
  %v637 = vsub.f32 %v503, %v635
  %v638 = vsub.f32 %v516, %v635
  %v639 = vadd.f32 %v634, 1e-05
  %v640 = vrsqrt.pop %v639
  %v641 = vmul.f32 %v640, %v639
  %v642 = vmul.f32 %v641, %v640
  %v643 = vmul.f32 0.5, %v642
  %v644 = vsub.f32 1.5, %v643
  %v645 = vmul.f32 %v640, %v644
  %vm646 = vweird.f32 %v639
  %vm647 = vweird.f32 %v640
  %vm648 = vmor %vm646, %vm647
  %v649 = vsel %vm648, %v640, %v645
  %v651 = vrot.slane %v649, 1
  %s652 = vtos %v651
  %v653 = vstv %s652
  %v655 = vmul.f32 %v636, %v653
  %v656 = vmul.f32 %v637, %v653
  %v657 = vmul.f32 %v638, %v653
  %659 = vset.pattern.permute.xlu0 0
  %660 = vperm.xlu0 %659, %v558
  %v661 = vpop.permute.xlu0 %660
  %v663 = vmul.f32 %v655, %v661
  %v664 = vmul.f32 %v656, %v661
  %v665 = vmul.f32 %v657, %v661
  %667 = vset.pattern.permute.xlu0 0
  %668 = vperm.xlu0 %667, %v559
  %v669 = vpop.permute.xlu0 %668
  %v671 = vadd.f32 %v663, %v669
  %v672 = vadd.f32 %v664, %v669
  %v673 = vadd.f32 %v665, %v669
  %v674 = vmul.f32 %v671, 0.5
  %v675 = vmul.f32 %v672, 0.5
  %v676 = vmul.f32 %v673, 0.5
  %v677 = vmul.f32 %v671, 0.70710677
  %v678 = vmul.f32 %v672, 0.70710677
  %v679 = vmul.f32 %v673, 0.70710677
  %v680 = vand.u32 2147483647, %v677
  %v681 = vand.u32 2147483647, %v678
  %v682 = vand.u32 2147483647, %v679
  %v683 = vmul.f32 %v680, 0.3275911
  %v684 = vmul.f32 %v681, 0.3275911
  %v685 = vmul.f32 %v682, 0.3275911
  %v686 = vadd.f32 %v683, 1.0
  %v687 = vadd.f32 %v684, 1.0
  %v688 = vadd.f32 %v685, 1.0
  %v689 = vrcp.pop %v686
  %v690 = vmul.f32 %v686, %v689
  %v691 = vsub.f32 1.0, %v690
  %v692 = vmul.f32 %v689, %v691
  %v693 = vadd.f32 %v689, %v692
  %vm694 = vweird.f32 %v686
  %vm695 = vweird.f32 %v689
  %vm696 = vmor %vm694, %vm695
  %v697 = vsel %vm696, %v689, %v693
  %v698 = vand.u32 2147483647, %v686
  %vm699 = vcmp.eq.f32.partialorder %v698, 8.507059e+37
  %v700 = vand.u32 %v686, 2147483648
  %v701 = vor.u32 1.1754944e-38, %v700
  %v702 = vsel %vm699, %v701, %v697
  %v703 = vmul.f32 1.0, %v702
  %v704 = vrcp.pop %v687
  %v705 = vmul.f32 %v687, %v704
  %v706 = vsub.f32 1.0, %v705
  %v707 = vmul.f32 %v704, %v706
  %v708 = vadd.f32 %v704, %v707
  %vm709 = vweird.f32 %v687
  %vm710 = vweird.f32 %v704
  %vm711 = vmor %vm709, %vm710
  %v712 = vsel %vm711, %v704, %v708
  %v713 = vand.u32 2147483647, %v687
  %vm714 = vcmp.eq.f32.partialorder %v713, 8.507059e+37
  %v715 = vand.u32 %v687, 2147483648
  %v716 = vor.u32 1.1754944e-38, %v715
  %v717 = vsel %vm714, %v716, %v712
  %v718 = vmul.f32 1.0, %v717
  %v719 = vrcp.pop %v688
  %v720 = vmul.f32 %v688, %v719
  %v721 = vsub.f32 1.0, %v720
  %v722 = vmul.f32 %v719, %v721
  %v723 = vadd.f32 %v719, %v722
  %vm724 = vweird.f32 %v688
  %vm725 = vweird.f32 %v719
  %vm726 = vmor %vm724, %vm725
  %v727 = vsel %vm726, %v719, %v723
  %v728 = vand.u32 2147483647, %v688
  %vm729 = vcmp.eq.f32.partialorder %v728, 8.507059e+37
  %v730 = vand.u32 %v688, 2147483648
  %v731 = vor.u32 1.1754944e-38, %v730
  %v732 = vsel %vm729, %v731, %v727
  %v733 = vmul.f32 1.0, %v732
  %v734 = vmul.f32 %v703, 1.0614054
  %v735 = vmul.f32 %v718, 1.0614054
  %v736 = vmul.f32 %v733, 1.0614054
  %v737 = vadd.f32 %v734, -1.4531521
  %v738 = vadd.f32 %v735, -1.4531521
  %v739 = vadd.f32 %v736, -1.4531521
  %v740 = vmul.f32 %v703, %v737
  %v741 = vmul.f32 %v718, %v738
  %v742 = vmul.f32 %v733, %v739
  %v743 = vadd.f32 %v740, 1.4214138
  %v744 = vadd.f32 %v741, 1.4214138
  %v745 = vadd.f32 %v742, 1.4214138
  %v746 = vmul.f32 %v703, %v743
  %v747 = vmul.f32 %v718, %v744
  %v748 = vmul.f32 %v733, %v745
  %v749 = vadd.f32 %v746, -0.28449672
  %v750 = vadd.f32 %v747, -0.28449672
  %v751 = vadd.f32 %v748, -0.28449672
  %v752 = vmul.f32 %v703, %v749
  %v753 = vmul.f32 %v718, %v750
  %v754 = vmul.f32 %v733, %v751
  %v755 = vadd.f32 %v752, 0.2548296
  %v756 = vadd.f32 %v753, 0.2548296
  %v757 = vadd.f32 %v754, 0.2548296
  %v758 = vmul.f32 %v703, %v755
  %v759 = vmul.f32 %v718, %v756
  %v760 = vmul.f32 %v733, %v757
  %v761 = vsub.f32 0.0, %v680
  %v762 = vsub.f32 0.0, %v681
  %v763 = vsub.f32 0.0, %v682
  %v764 = vmul.f32 %v761, %v680
  %v765 = vmul.f32 %v762, %v681
  %v766 = vmul.f32 %v763, %v682
  %v767 = vmul.f32 %v764, 1.442695
  %v768 = vpow.pop %v767
  %v769 = vmul.f32 %v765, 1.442695
  %v770 = vpow.pop %v769
  %v771 = vmul.f32 %v766, 1.442695
  %v772 = vpow.pop %v771
  %v773 = vmul.f32 %v758, %v768
  %v774 = vmul.f32 %v759, %v770
  %v775 = vmul.f32 %v760, %v772
  %v776 = vsub.f32 1.0, %v773
  %v777 = vsub.f32 1.0, %v774
  %v778 = vsub.f32 1.0, %v775
  %vm779 = vcmp.lt.f32.partialorder %v677, 0.0
  %vm780 = vcmp.lt.f32.partialorder %v678, 0.0
  %vm781 = vcmp.lt.f32.partialorder %v679, 0.0
  %v782 = vsub.f32 0.0, %v776
  %v783 = vsub.f32 0.0, %v777
  %v784 = vsub.f32 0.0, %v778
  %v785 = vsel %vm779, %v782, %v776
  %v786 = vsel %vm780, %v783, %v777
  %v787 = vsel %vm781, %v784, %v778
  %v788 = vadd.f32 %v785, 1.0
  %v789 = vadd.f32 %v786, 1.0
  %v790 = vadd.f32 %v787, 1.0
  %v791 = vmul.f32 %v674, %v788
  %v792 = vmul.f32 %v675, %v789
  %v793 = vmul.f32 %v676, %v790
  %v794 = vmul.f32 %v791, %v562
  %v795 = vmul.f32 %v792, %v563
  %v796 = vmul.f32 %v793, %v564
  %v797 = vpack.c.bf16 %v795, %v794
  %v798 = vpack.c.bf16 %v796, %v796
  %801 = vrot.lane.b32.xlu0 %v797, 19
  %v802 = vpop.permute.xlu0 %801
  %803 = vrot.lane.b32.xlu0 %v798, 19
  %v804 = vpop.permute.xlu0 %803
  %v805 = vrot.slane %v802, 4
  %v806 = vrot.slane %v804, 4
  %vm807 = vcmask 154624
  %v808 = vsel %vm807, %v805, %v802
  %vm809 = vcmask 1043456
  %v810 = vsel %vm809, %v805, %v806
  %v811 = vsel %vm807, %v810, %v804
  %vm814 = vcmask 1043608
  %vm815 = vcmask 1047556
  %vm816 = vmor %vm815, %vm814
  %817 = vst.msk [vmem:[#allocation2] sm:$0xff] %vm816, %v808
  %vm818 = vcmask 154628
  %vm819 = vmor %vm818, %vm377
  %820 = vst.msk [vmem:[#allocation2 + $0x8] sm:$0xff] %vm819, %v811
  %v821 = vld [vmem:[%s3 + $0x3] sm:$0x7]
  %v823 = vperm.slane %v821, 0
  %v824 = vperm.slane %v821, 1
  %v825 = vperm.slane %v821, 2
  %v829 = vmul.f32 %v529, %v823
  %v830 = vmul.f32 %v542, %v824
  %v831 = vmul.f32 %v555, %v825
  %v832 = vrot.slane %v829, 4
  %v833 = vadd.f32 %v829, %v832
  %v834 = vrot.slane %v833, 2
  %v835 = vadd.f32 %v833, %v834
  %v836 = vrot.slane %v835, 1
  %v837 = vadd.f32 %v835, %v836
  %v838 = vrot.slane %v830, 4
  %v839 = vadd.f32 %v830, %v838
  %v840 = vrot.slane %v839, 2
  %v841 = vadd.f32 %v839, %v840
  %v842 = vrot.slane %v841, 1
  %v843 = vadd.f32 %v841, %v842
  %v844 = vrot.slane %v831, 4
  %v845 = vadd.f32 %v831, %v844
  %v846 = vrot.slane %v845, 2
  %v847 = vadd.f32 %v845, %v846
  %v848 = vrot.slane %v847, 1
  %v849 = vadd.f32 %v847, %v848
  %v850 = vmul.f32 %v829, %v529
  %v851 = vmul.f32 %v830, %v542
  %v852 = vmul.f32 %v831, %v555
  %v853 = vrot.slane %v850, 4
  %v854 = vadd.f32 %v850, %v853
  %v855 = vrot.slane %v854, 2
  %v856 = vadd.f32 %v854, %v855
  %v857 = vrot.slane %v856, 1
  %v858 = vadd.f32 %v856, %v857
  %v859 = vrot.slane %v851, 4
  %v860 = vadd.f32 %v851, %v859
  %v861 = vrot.slane %v860, 2
  %v862 = vadd.f32 %v860, %v861
  %v863 = vrot.slane %v862, 1
  %v864 = vadd.f32 %v862, %v863
  %v865 = vrot.slane %v852, 4
  %v866 = vadd.f32 %v852, %v865
  %v867 = vrot.slane %v866, 2
  %v868 = vadd.f32 %v866, %v867
  %v869 = vrot.slane %v868, 1
  %v870 = vadd.f32 %v868, %v869
  %v871 = vsel %vm610, %v837, %v858
  %v872 = vsel %vm610, %v843, %v864
  %v873 = vsel %vm610, %v849, %v870
  %v874 = vsel %vm364, %v871, 0.0
  %v875 = vsel %vm364, %v872, 0.0
  %v876 = vadd.f32 %v874, %v875
  %v877 = vsel %vm364, %v873, 0.0
  %v878 = vadd.f32 %v876, %v877
  %879 = vadd.xlane.f32.xlu0 %v878
  %v880 = vpop.xlane.xlu0 %879
  %v881 = vmul.f32 %v880, %v627
  %v882 = vmul.f32 %v881, %v881
  %v884 = vrot.slane %v882, 7
  %v886 = vsub.f32 %v881, %v884
  %v887 = vmax.f32 %v886, 0.0
  %v888 = vperm.slane %v881, 0
  %v889 = vsub.f32 %v529, %v888
  %v890 = vsub.f32 %v542, %v888
  %v891 = vsub.f32 %v555, %v888
  %v892 = vadd.f32 %v887, 1e-05
  %v893 = vrsqrt.pop %v892
  %v894 = vmul.f32 %v893, %v892
  %v895 = vmul.f32 %v894, %v893
  %v896 = vmul.f32 0.5, %v895
  %v897 = vsub.f32 1.5, %v896
  %v898 = vmul.f32 %v893, %v897
  %vm899 = vweird.f32 %v892
  %vm900 = vweird.f32 %v893
  %vm901 = vmor %vm899, %vm900
  %v902 = vsel %vm901, %v893, %v898
  %v904 = vrot.slane %v902, 1
  %s905 = vtos %v904
  %v906 = vstv %s905
  %v908 = vmul.f32 %v889, %v906
  %v909 = vmul.f32 %v890, %v906
  %v910 = vmul.f32 %v891, %v906
  %v911 = vmul.f32 %v908, %v661
  %v912 = vmul.f32 %v909, %v661
  %v913 = vmul.f32 %v910, %v661
  %v914 = vadd.f32 %v911, %v669
  %v915 = vadd.f32 %v912, %v669
  %v916 = vadd.f32 %v913, %v669
  %v917 = vmul.f32 %v914, 0.5
  %v918 = vmul.f32 %v915, 0.5
  %v919 = vmul.f32 %v916, 0.5
  %v920 = vmul.f32 %v914, 0.70710677
  %v921 = vmul.f32 %v915, 0.70710677
  %v922 = vmul.f32 %v916, 0.70710677
  %v923 = vand.u32 2147483647, %v920
  %v924 = vand.u32 2147483647, %v921
  %v925 = vand.u32 2147483647, %v922
  %v926 = vmul.f32 %v923, 0.3275911
  %v927 = vmul.f32 %v924, 0.3275911
  %v928 = vmul.f32 %v925, 0.3275911
  %v929 = vadd.f32 %v926, 1.0
  %v930 = vadd.f32 %v927, 1.0
  %v931 = vadd.f32 %v928, 1.0
  %v932 = vrcp.pop %v929
  %v933 = vmul.f32 %v929, %v932
  %v934 = vsub.f32 1.0, %v933
  %v935 = vmul.f32 %v932, %v934
  %v936 = vadd.f32 %v932, %v935
  %vm937 = vweird.f32 %v929
  %vm938 = vweird.f32 %v932
  %vm939 = vmor %vm937, %vm938
  %v940 = vsel %vm939, %v932, %v936
  %v941 = vand.u32 2147483647, %v929
  %vm942 = vcmp.eq.f32.partialorder %v941, 8.507059e+37
  %v943 = vand.u32 %v929, 2147483648
  %v944 = vor.u32 1.1754944e-38, %v943
  %v945 = vsel %vm942, %v944, %v940
  %v946 = vmul.f32 1.0, %v945
  %v947 = vrcp.pop %v930
  %v948 = vmul.f32 %v930, %v947
  %v949 = vsub.f32 1.0, %v948
  %v950 = vmul.f32 %v947, %v949
  %v951 = vadd.f32 %v947, %v950
  %vm952 = vweird.f32 %v930
  %vm953 = vweird.f32 %v947
  %vm954 = vmor %vm952, %vm953
  %v955 = vsel %vm954, %v947, %v951
  %v956 = vand.u32 2147483647, %v930
  %vm957 = vcmp.eq.f32.partialorder %v956, 8.507059e+37
  %v958 = vand.u32 %v930, 2147483648
  %v959 = vor.u32 1.1754944e-38, %v958
  %v960 = vsel %vm957, %v959, %v955
  %v961 = vmul.f32 1.0, %v960
  %v962 = vrcp.pop %v931
  %v963 = vmul.f32 %v931, %v962
  %v964 = vsub.f32 1.0, %v963
  %v965 = vmul.f32 %v962, %v964
  %v966 = vadd.f32 %v962, %v965
  %vm967 = vweird.f32 %v931
  %vm968 = vweird.f32 %v962
  %vm969 = vmor %vm967, %vm968
  %v970 = vsel %vm969, %v962, %v966
  %v971 = vand.u32 2147483647, %v931
  %vm972 = vcmp.eq.f32.partialorder %v971, 8.507059e+37
  %v973 = vand.u32 %v931, 2147483648
  %v974 = vor.u32 1.1754944e-38, %v973
  %v975 = vsel %vm972, %v974, %v970
  %v976 = vmul.f32 1.0, %v975
  %v977 = vmul.f32 %v946, 1.0614054
  %v978 = vmul.f32 %v961, 1.0614054
  %v979 = vmul.f32 %v976, 1.0614054
  %v980 = vadd.f32 %v977, -1.4531521
  %v981 = vadd.f32 %v978, -1.4531521
  %v982 = vadd.f32 %v979, -1.4531521
  %v983 = vmul.f32 %v946, %v980
  %v984 = vmul.f32 %v961, %v981
  %v985 = vmul.f32 %v976, %v982
  %v986 = vadd.f32 %v983, 1.4214138
  %v987 = vadd.f32 %v984, 1.4214138
  %v988 = vadd.f32 %v985, 1.4214138
  %v989 = vmul.f32 %v946, %v986
  %v990 = vmul.f32 %v961, %v987
  %v991 = vmul.f32 %v976, %v988
  %v992 = vadd.f32 %v989, -0.28449672
  %v993 = vadd.f32 %v990, -0.28449672
  %v994 = vadd.f32 %v991, -0.28449672
  %v995 = vmul.f32 %v946, %v992
  %v996 = vmul.f32 %v961, %v993
  %v997 = vmul.f32 %v976, %v994
  %v998 = vadd.f32 %v995, 0.2548296
  %v999 = vadd.f32 %v996, 0.2548296
  %v1000 = vadd.f32 %v997, 0.2548296
  %v1001 = vmul.f32 %v946, %v998
  %v1002 = vmul.f32 %v961, %v999
  %v1003 = vmul.f32 %v976, %v1000
  %v1004 = vsub.f32 0.0, %v923
  %v1005 = vsub.f32 0.0, %v924
  %v1006 = vsub.f32 0.0, %v925
  %v1007 = vmul.f32 %v1004, %v923
  %v1008 = vmul.f32 %v1005, %v924
  %v1009 = vmul.f32 %v1006, %v925
  %v1010 = vmul.f32 %v1007, 1.442695
  %v1011 = vpow.pop %v1010
  %v1012 = vmul.f32 %v1008, 1.442695
  %v1013 = vpow.pop %v1012
  %v1014 = vmul.f32 %v1009, 1.442695
  %v1015 = vpow.pop %v1014
  %v1016 = vmul.f32 %v1001, %v1011
  %v1017 = vmul.f32 %v1002, %v1013
  %v1018 = vmul.f32 %v1003, %v1015
  %v1019 = vsub.f32 1.0, %v1016
  %v1020 = vsub.f32 1.0, %v1017
  %v1021 = vsub.f32 1.0, %v1018
  %vm1022 = vcmp.lt.f32.partialorder %v920, 0.0
  %vm1023 = vcmp.lt.f32.partialorder %v921, 0.0
  %vm1024 = vcmp.lt.f32.partialorder %v922, 0.0
  %v1025 = vsub.f32 0.0, %v1019
  %v1026 = vsub.f32 0.0, %v1020
  %v1027 = vsub.f32 0.0, %v1021
  %v1028 = vsel %vm1022, %v1025, %v1019
  %v1029 = vsel %vm1023, %v1026, %v1020
  %v1030 = vsel %vm1024, %v1027, %v1021
  %v1031 = vadd.f32 %v1028, 1.0
  %v1032 = vadd.f32 %v1029, 1.0
  %v1033 = vadd.f32 %v1030, 1.0
  %v1034 = vmul.f32 %v917, %v1031
  %v1035 = vmul.f32 %v918, %v1032
  %v1036 = vmul.f32 %v919, %v1033
  %v1037 = vmul.f32 %v1034, %v823
  %v1038 = vmul.f32 %v1035, %v824
  %v1039 = vmul.f32 %v1036, %v825
  %v1040 = vpack.c.bf16 %v1038, %v1037
  %v1041 = vpack.c.bf16 %v1039, %v1039
  %1044 = vrot.lane.b32.xlu0 %v1040, 19
  %v1045 = vpop.permute.xlu0 %1044
  %1046 = vrot.lane.b32.xlu0 %v1041, 19
  %v1047 = vpop.permute.xlu0 %1046
  %v1048 = vrot.slane %v1045, 4
  %v1049 = vrot.slane %v1047, 4
  %v1050 = vsel %vm807, %v1048, %v1045
  %v1051 = vsel %vm809, %v1048, %v1049
  %v1052 = vsel %vm807, %v1051, %v1047
  %1055 = vst.msk [vmem:[#allocation2 + $0xc] sm:$0xff] %vm816, %v1050
  %1056 = vst.msk [vmem:[#allocation2 + $0x14] sm:$0xff] %vm819, %v1052
  %v1057 = vld [vmem:[#allocation2] sm:$0xff]
  %v1058 = vld [vmem:[#allocation2 + $0x8] sm:$0xff]
  %v1059 = vld [vmem:[#allocation2 + $0x10] sm:$0xff]
  %v1060 = vld [vmem:[#allocation2] sm:$0xff]
  %v1061 = vld [vmem:[#allocation2 + $0x8] sm:$0xff]
  %v1062 = vld [vmem:[#allocation2 + $0x10] sm:$0xff]
  %v1063 = vld [vmem:[#allocation2 + $0x18] sm:$0xf]
  %v1067 = vunpack.c.l.b16 %v1057
  %v1068 = vunpack.c.h.b16 %v1057
  %v1069 = vunpack.c.l.b16 %v1058
  %v1070 = vunpack.c.h.b16 %v1058
  %v1071 = vunpack.c.l.b16 %v1059
  %v1072 = vunpack.c.h.b16 %v1059
  %v1073 = vpack.c.b16 %v1067, %v1067
  %v1074 = vpack.c.b16 %v1068, %v1068
  %v1075 = vpack.c.b16 %v1069, %v1069
  %v1076 = vpack.c.b16 %v1070, %v1070
  %v1077 = vpack.c.b16 %v1071, %v1071
  %v1078 = vpack.c.b16 %v1072, %v1072
  %v1083 = vunpack.c.l.b16 %v1060
  %v1084 = vunpack.c.h.b16 %v1060
  %v1085 = vunpack.c.l.b16 %v1061
  %v1086 = vunpack.c.h.b16 %v1061
  %v1087 = vunpack.c.l.b16 %v1062
  %v1088 = vunpack.c.h.b16 %v1062
  %v1089 = vunpack.c.l.b16 %v1063
  %v1090 = vpack.c.b16 %v1083, %v1083
  %v1091 = vpack.c.b16 %v1084, %v1084
  %v1092 = vpack.c.b16 %v1085, %v1085
  %v1093 = vpack.c.b16 %v1086, %v1086
  %v1094 = vpack.c.b16 %v1087, %v1087
  %v1095 = vpack.c.b16 %v1088, %v1088
  %v1096 = vpack.c.b16 %v1089, %v1089
  %1097 = vrot.lane.b32.xlu0 %v1090, 127
  %v1098 = vpop.permute.xlu0 %1097
  %1099 = vrot.lane.b32.xlu0 %v1091, 127
  %v1100 = vpop.permute.xlu0 %1099
  %1101 = vrot.lane.b32.xlu0 %v1092, 127
  %v1102 = vpop.permute.xlu0 %1101
  %1103 = vrot.lane.b32.xlu0 %v1093, 127
  %v1104 = vpop.permute.xlu0 %1103
  %1105 = vrot.lane.b32.xlu0 %v1094, 127
  %v1106 = vpop.permute.xlu0 %1105
  %1107 = vrot.lane.b32.xlu0 %v1095, 127
  %v1108 = vpop.permute.xlu0 %1107
  %1109 = vrot.lane.b32.xlu0 %v1096, 127
  %v1110 = vpop.permute.xlu0 %1109
  %v1111 = vsel %vm86, %v1098, %v1100
  %v1112 = vsel %vm86, %v1100, %v1102
  %v1113 = vsel %vm86, %v1102, %v1104
  %v1114 = vsel %vm86, %v1104, %v1106
  %v1115 = vsel %vm86, %v1106, %v1108
  %v1116 = vsel %vm86, %v1108, %v1110
  %1117 = vrot.lane.b32.xlu0 %v1090, 126
  %v1118 = vpop.permute.xlu0 %1117
  %1119 = vrot.lane.b32.xlu0 %v1091, 126
  %v1120 = vpop.permute.xlu0 %1119
  %1121 = vrot.lane.b32.xlu0 %v1092, 126
  %v1122 = vpop.permute.xlu0 %1121
  %1123 = vrot.lane.b32.xlu0 %v1093, 126
  %v1124 = vpop.permute.xlu0 %1123
  %1125 = vrot.lane.b32.xlu0 %v1094, 126
  %v1126 = vpop.permute.xlu0 %1125
  %1127 = vrot.lane.b32.xlu0 %v1095, 126
  %v1128 = vpop.permute.xlu0 %1127
  %1129 = vrot.lane.b32.xlu0 %v1096, 126
  %v1130 = vpop.permute.xlu0 %1129
  %v1131 = vsel %vm125, %v1118, %v1120
  %v1132 = vsel %vm125, %v1120, %v1122
  %v1133 = vsel %vm125, %v1122, %v1124
  %v1134 = vsel %vm125, %v1124, %v1126
  %v1135 = vsel %vm125, %v1126, %v1128
  %v1136 = vsel %vm125, %v1128, %v1130
  %1137 = vrot.lane.b32.xlu0 %v1090, 110
  %v1138 = vpop.permute.xlu0 %1137
  %1139 = vrot.lane.b32.xlu0 %v1091, 110
  %v1140 = vpop.permute.xlu0 %1139
  %1141 = vrot.lane.b32.xlu0 %v1092, 110
  %v1142 = vpop.permute.xlu0 %1141
  %1143 = vrot.lane.b32.xlu0 %v1093, 110
  %v1144 = vpop.permute.xlu0 %1143
  %1145 = vrot.lane.b32.xlu0 %v1094, 110
  %v1146 = vpop.permute.xlu0 %1145
  %1147 = vrot.lane.b32.xlu0 %v1095, 110
  %v1148 = vpop.permute.xlu0 %1147
  %1149 = vrot.lane.b32.xlu0 %v1096, 110
  %v1150 = vpop.permute.xlu0 %1149
  %v1151 = vsel %vm164, %v1138, %v1140
  %v1152 = vsel %vm164, %v1140, %v1142
  %v1153 = vsel %vm164, %v1142, %v1144
  %v1154 = vsel %vm164, %v1144, %v1146
  %v1155 = vsel %vm164, %v1146, %v1148
  %v1156 = vsel %vm164, %v1148, %v1150
  %1157 = vrot.lane.b32.xlu0 %v1090, 109
  %v1158 = vpop.permute.xlu0 %1157
  %1159 = vrot.lane.b32.xlu0 %v1091, 109
  %v1160 = vpop.permute.xlu0 %1159
  %1161 = vrot.lane.b32.xlu0 %v1092, 109
  %v1162 = vpop.permute.xlu0 %1161
  %1163 = vrot.lane.b32.xlu0 %v1093, 109
  %v1164 = vpop.permute.xlu0 %1163
  %1165 = vrot.lane.b32.xlu0 %v1094, 109
  %v1166 = vpop.permute.xlu0 %1165
  %1167 = vrot.lane.b32.xlu0 %v1095, 109
  %v1168 = vpop.permute.xlu0 %1167
  %1169 = vrot.lane.b32.xlu0 %v1096, 109
  %v1170 = vpop.permute.xlu0 %1169
  %v1171 = vsel %vm202, %v1158, %v1160
  %v1172 = vsel %vm202, %v1160, %v1162
  %v1173 = vsel %vm202, %v1162, %v1164
  %v1174 = vsel %vm202, %v1164, %v1166
  %v1175 = vsel %vm202, %v1166, %v1168
  %v1176 = vsel %vm202, %v1168, %v1170
  %1177 = vrot.lane.b32.xlu0 %v1090, 108
  %v1178 = vpop.permute.xlu0 %1177
  %1179 = vrot.lane.b32.xlu0 %v1091, 108
  %v1180 = vpop.permute.xlu0 %1179
  %1181 = vrot.lane.b32.xlu0 %v1092, 108
  %v1182 = vpop.permute.xlu0 %1181
  %1183 = vrot.lane.b32.xlu0 %v1093, 108
  %v1184 = vpop.permute.xlu0 %1183
  %1185 = vrot.lane.b32.xlu0 %v1094, 108
  %v1186 = vpop.permute.xlu0 %1185
  %1187 = vrot.lane.b32.xlu0 %v1095, 108
  %v1188 = vpop.permute.xlu0 %1187
  %1189 = vrot.lane.b32.xlu0 %v1096, 108
  %v1190 = vpop.permute.xlu0 %1189
  %v1191 = vsel %vm241, %v1178, %v1180
  %v1192 = vsel %vm241, %v1180, %v1182
  %v1193 = vsel %vm241, %v1182, %v1184
  %v1194 = vsel %vm241, %v1184, %v1186
  %v1195 = vsel %vm241, %v1186, %v1188
  %v1196 = vsel %vm241, %v1188, %v1190
  %1197 = vrot.lane.b32.xlu0 %v1090, 92
  %v1198 = vpop.permute.xlu0 %1197
  %1199 = vrot.lane.b32.xlu0 %v1091, 92
  %v1200 = vpop.permute.xlu0 %1199
  %1201 = vrot.lane.b32.xlu0 %v1092, 92
  %v1202 = vpop.permute.xlu0 %1201
  %1203 = vrot.lane.b32.xlu0 %v1093, 92
  %v1204 = vpop.permute.xlu0 %1203
  %1205 = vrot.lane.b32.xlu0 %v1094, 92
  %v1206 = vpop.permute.xlu0 %1205
  %1207 = vrot.lane.b32.xlu0 %v1095, 92
  %v1208 = vpop.permute.xlu0 %1207
  %1209 = vrot.lane.b32.xlu0 %v1096, 92
  %v1210 = vpop.permute.xlu0 %1209
  %v1211 = vsel %vm280, %v1198, %v1200
  %v1212 = vsel %vm280, %v1200, %v1202
  %v1213 = vsel %vm280, %v1202, %v1204
  %v1214 = vsel %vm280, %v1204, %v1206
  %v1215 = vsel %vm280, %v1206, %v1208
  %v1216 = vsel %vm280, %v1208, %v1210
  %1217 = vrot.lane.b32.xlu0 %v1090, 91
  %v1218 = vpop.permute.xlu0 %1217
  %1219 = vrot.lane.b32.xlu0 %v1091, 91
  %v1220 = vpop.permute.xlu0 %1219
  %1221 = vrot.lane.b32.xlu0 %v1092, 91
  %v1222 = vpop.permute.xlu0 %1221
  %1223 = vrot.lane.b32.xlu0 %v1093, 91
  %v1224 = vpop.permute.xlu0 %1223
  %1225 = vrot.lane.b32.xlu0 %v1094, 91
  %v1226 = vpop.permute.xlu0 %1225
  %1227 = vrot.lane.b32.xlu0 %v1095, 91
  %v1228 = vpop.permute.xlu0 %1227
  %1229 = vrot.lane.b32.xlu0 %v1096, 91
  %v1230 = vpop.permute.xlu0 %1229
  %v1231 = vsel %vm319, %v1218, %v1220
  %v1232 = vsel %vm319, %v1220, %v1222
  %v1233 = vsel %vm319, %v1222, %v1224
  %v1234 = vsel %vm319, %v1224, %v1226
  %v1235 = vsel %vm319, %v1226, %v1228
  %v1236 = vsel %vm319, %v1228, %v1230
  %1237 = vrot.lane.b32.xlu0 %v1090, 90
  %v1238 = vpop.permute.xlu0 %1237
  %1239 = vrot.lane.b32.xlu0 %v1091, 90
  %v1240 = vpop.permute.xlu0 %1239
  %1241 = vrot.lane.b32.xlu0 %v1092, 90
  %v1242 = vpop.permute.xlu0 %1241
  %1243 = vrot.lane.b32.xlu0 %v1093, 90
  %v1244 = vpop.permute.xlu0 %1243
  %1245 = vrot.lane.b32.xlu0 %v1094, 90
  %v1246 = vpop.permute.xlu0 %1245
  %1247 = vrot.lane.b32.xlu0 %v1095, 90
  %v1248 = vpop.permute.xlu0 %1247
  %1249 = vrot.lane.b32.xlu0 %v1096, 90
  %v1250 = vpop.permute.xlu0 %1249
  %v1251 = vsel %vm357, %v1238, %v1240
  %v1252 = vsel %vm357, %v1240, %v1242
  %v1253 = vsel %vm357, %v1242, %v1244
  %v1254 = vsel %vm357, %v1244, %v1246
  %v1255 = vsel %vm357, %v1246, %v1248
  %v1256 = vsel %vm357, %v1248, %v1250
  %v1259 = vsel %vm377, %v1073, %v1111
  %v1263 = vsel %vm377, %v1074, %v1112
  %v1267 = vsel %vm377, %v1075, %v1113
  %v1271 = vsel %vm377, %v1076, %v1114
  %v1275 = vsel %vm377, %v1077, %v1115
  %v1279 = vsel %vm377, %v1078, %v1116
  %v1283 = vsel %vm377, %v1131, %v1151
  %v1287 = vsel %vm377, %v1132, %v1152
  %v1291 = vsel %vm377, %v1133, %v1153
  %v1295 = vsel %vm377, %v1134, %v1154
  %v1299 = vsel %vm377, %v1135, %v1155
  %v1303 = vsel %vm377, %v1136, %v1156
  %v1307 = vsel %vm377, %v1171, %v1191
  %v1311 = vsel %vm377, %v1172, %v1192
  %v1315 = vsel %vm377, %v1173, %v1193
  %v1319 = vsel %vm377, %v1174, %v1194
  %v1323 = vsel %vm377, %v1175, %v1195
  %v1327 = vsel %vm377, %v1176, %v1196
  %v1331 = vsel %vm377, %v1211, %v1231
  %v1335 = vsel %vm377, %v1212, %v1232
  %v1339 = vsel %vm377, %v1213, %v1233
  %v1343 = vsel %vm377, %v1214, %v1234
  %v1347 = vsel %vm377, %v1215, %v1235
  %v1351 = vsel %vm377, %v1216, %v1236
  %v1353 = vld [vmem:[%s2] sm:$0xf]
  %vm1354 = vcmask 588800
  %v1356 = vsel %vm1354, %v1353, 0
  %v1359 = vsel %vm377, %v1251, 0
  %v1362 = vsel %vm377, %v1252, 0
  %v1365 = vsel %vm377, %v1253, 0
  %v1368 = vsel %vm377, %v1254, 0
  %v1371 = vsel %vm377, %v1255, 0
  %v1374 = vsel %vm377, %v1256, 0
  %1376 = vmatpush.bf16.msra.mxu0 0
  %1377 = vmatpush.bf16.msra.mxu0 0
  %1378 = vmatpush.bf16.msra.mxu0 0
  %1379 = vmatpush.bf16.msra.mxu0 %v1359
  %1380 = vmatpush.bf16.msra.mxu0 %v1331
  %1381 = vmatpush.bf16.msra.mxu0 %v1307
  %1382 = vmatpush.bf16.msra.mxu0 %v1283
  %1383 = vmatpush.bf16.msra.mxu0 %v1259
  %1384 = vmatmul.bf16.gmra.mxu0 %v1356
  %v1385 = vpop.f32.mrf.mxu0
  %v1386 = vadd.f32 0.0, %v1385
  %v1387 = vpop.f32.mrf.mxu0
  %1388 = vdwg.mxu0
  %1389 = vmatpush.bf16.msra.mxu0 0
  %1390 = vmatpush.bf16.msra.mxu0 0
  %1391 = vmatpush.bf16.msra.mxu0 0
  %1392 = vmatpush.bf16.msra.mxu0 %v1362
  %1393 = vmatpush.bf16.msra.mxu0 %v1335
  %1394 = vmatpush.bf16.msra.mxu0 %v1311
  %1395 = vmatpush.bf16.msra.mxu0 %v1287
  %1396 = vmatpush.bf16.msra.mxu0 %v1263
  %1397 = vmatmul.bf16.gmra.mxu0 %v1356
  %v1398 = vpop.f32.mrf.mxu0
  %v1399 = vadd.f32 0.0, %v1398
  %v1400 = vpop.f32.mrf.mxu0
  %1401 = vdwg.mxu0
  %1402 = vmatpush.bf16.msra.mxu0 0
  %1403 = vmatpush.bf16.msra.mxu0 0
  %1404 = vmatpush.bf16.msra.mxu0 0
  %1405 = vmatpush.bf16.msra.mxu0 %v1365
  %1406 = vmatpush.bf16.msra.mxu0 %v1339
  %1407 = vmatpush.bf16.msra.mxu0 %v1315
  %1408 = vmatpush.bf16.msra.mxu0 %v1291
  %1409 = vmatpush.bf16.msra.mxu0 %v1267
  %1410 = vmatmul.bf16.gmra.mxu0 %v1356
  %v1411 = vpop.f32.mrf.mxu0
  %v1412 = vadd.f32 0.0, %v1411
  %v1413 = vpop.f32.mrf.mxu0
  %1414 = vdwg.mxu0
  %1415 = vmatpush.bf16.msra.mxu0 0
  %1416 = vmatpush.bf16.msra.mxu0 0
  %1417 = vmatpush.bf16.msra.mxu0 0
  %1418 = vmatpush.bf16.msra.mxu0 %v1368
  %1419 = vmatpush.bf16.msra.mxu0 %v1343
  %1420 = vmatpush.bf16.msra.mxu0 %v1319
  %1421 = vmatpush.bf16.msra.mxu0 %v1295
  %1422 = vmatpush.bf16.msra.mxu0 %v1271
  %1423 = vmatmul.bf16.gmra.mxu0 %v1356
  %v1424 = vpop.f32.mrf.mxu0
  %v1425 = vadd.f32 0.0, %v1424
  %v1426 = vpop.f32.mrf.mxu0
  %1427 = vdwg.mxu0
  %1428 = vmatpush.bf16.msra.mxu0 0
  %1429 = vmatpush.bf16.msra.mxu0 0
  %1430 = vmatpush.bf16.msra.mxu0 0
  %1431 = vmatpush.bf16.msra.mxu0 %v1371
  %1432 = vmatpush.bf16.msra.mxu0 %v1347
  %1433 = vmatpush.bf16.msra.mxu0 %v1323
  %1434 = vmatpush.bf16.msra.mxu0 %v1299
  %1435 = vmatpush.bf16.msra.mxu0 %v1275
  %1436 = vmatmul.bf16.gmra.mxu0 %v1356
  %v1437 = vpop.f32.mrf.mxu0
  %v1438 = vadd.f32 0.0, %v1437
  %v1439 = vpop.f32.mrf.mxu0
  %1440 = vdwg.mxu0
  %1441 = vmatpush.bf16.msra.mxu0 0
  %1442 = vmatpush.bf16.msra.mxu0 0
  %1443 = vmatpush.bf16.msra.mxu0 0
  %1444 = vmatpush.bf16.msra.mxu0 %v1374
  %1445 = vmatpush.bf16.msra.mxu0 %v1351
  %1446 = vmatpush.bf16.msra.mxu0 %v1327
  %1447 = vmatpush.bf16.msra.mxu0 %v1303
  %1448 = vmatpush.bf16.msra.mxu0 %v1279
  %1449 = vmatmul.bf16.gmra.mxu0 %v1356
  %v1450 = vpop.f32.mrf.mxu0
  %v1451 = vadd.f32 0.0, %v1450
  %v1452 = vpop.f32.mrf.mxu0
  %1453 = vdwg.mxu0
  %v1454 = vld [vmem:[%s7] sm:$0xff]
  %v1455 = vld [vmem:[%s8] sm:$0xff]
  %v1456 = vld [vmem:[%s4] sm:$0x7]
  %v1458 = vperm.slane %v1456, 0
  %v1459 = vperm.slane %v1456, 1
  %v1460 = vperm.slane %v1456, 2
  %v1464 = vmul.f32 %v1386, %v1458
  %v1465 = vmul.f32 %v1399, %v1459
  %v1466 = vmul.f32 %v1412, %v1460
  %v1467 = vrot.slane %v1464, 4
  %v1468 = vadd.f32 %v1464, %v1467
  %v1469 = vrot.slane %v1468, 2
  %v1470 = vadd.f32 %v1468, %v1469
  %v1471 = vrot.slane %v1470, 1
  %v1472 = vadd.f32 %v1470, %v1471
  %v1473 = vrot.slane %v1465, 4
  %v1474 = vadd.f32 %v1465, %v1473
  %v1475 = vrot.slane %v1474, 2
  %v1476 = vadd.f32 %v1474, %v1475
  %v1477 = vrot.slane %v1476, 1
  %v1478 = vadd.f32 %v1476, %v1477
  %v1479 = vrot.slane %v1466, 4
  %v1480 = vadd.f32 %v1466, %v1479
  %v1481 = vrot.slane %v1480, 2
  %v1482 = vadd.f32 %v1480, %v1481
  %v1483 = vrot.slane %v1482, 1
  %v1484 = vadd.f32 %v1482, %v1483
  %v1485 = vmul.f32 %v1464, %v1386
  %v1486 = vmul.f32 %v1465, %v1399
  %v1487 = vmul.f32 %v1466, %v1412
  %v1488 = vrot.slane %v1485, 4
  %v1489 = vadd.f32 %v1485, %v1488
  %v1490 = vrot.slane %v1489, 2
  %v1491 = vadd.f32 %v1489, %v1490
  %v1492 = vrot.slane %v1491, 1
  %v1493 = vadd.f32 %v1491, %v1492
  %v1494 = vrot.slane %v1486, 4
  %v1495 = vadd.f32 %v1486, %v1494
  %v1496 = vrot.slane %v1495, 2
  %v1497 = vadd.f32 %v1495, %v1496
  %v1498 = vrot.slane %v1497, 1
  %v1499 = vadd.f32 %v1497, %v1498
  %v1500 = vrot.slane %v1487, 4
  %v1501 = vadd.f32 %v1487, %v1500
  %v1502 = vrot.slane %v1501, 2
  %v1503 = vadd.f32 %v1501, %v1502
  %v1504 = vrot.slane %v1503, 1
  %v1505 = vadd.f32 %v1503, %v1504
  %v1506 = vsel %vm610, %v1472, %v1493
  %v1507 = vsel %vm610, %v1478, %v1499
  %v1508 = vsel %vm610, %v1484, %v1505
  %v1509 = vsel %vm364, %v1506, 0.0
  %v1510 = vsel %vm364, %v1507, 0.0
  %v1511 = vadd.f32 %v1509, %v1510
  %v1512 = vsel %vm364, %v1508, 0.0
  %v1513 = vadd.f32 %v1511, %v1512
  %1514 = vadd.xlane.f32.xlu0 %v1513
  %v1515 = vpop.xlane.xlu0 %1514
  %v1516 = vrcp.pop 512.0
  %v1517 = vmul.f32 512.0, %v1516
  %v1518 = vsub.f32 1.0, %v1517
  %v1519 = vmul.f32 %v1516, %v1518
  %v1520 = vadd.f32 %v1516, %v1519
  %vm1521 = vweird.f32 %v1516
  %v1522 = vsel %vm1521, %v1516, %v1520
  %v1523 = vmul.f32 %v1515, %v1522
  %v1524 = vmul.f32 %v1523, %v1523
  %v1526 = vrot.slane %v1524, 7
  %v1528 = vsub.f32 %v1523, %v1526
  %v1529 = vmax.f32 %v1528, 0.0
  %v1530 = vperm.slane %v1523, 0
  %v1531 = vsub.f32 %v1386, %v1530
  %v1532 = vsub.f32 %v1399, %v1530
  %v1533 = vsub.f32 %v1412, %v1530
  %v1534 = vadd.f32 %v1529, 1e-05
  %v1535 = vrsqrt.pop %v1534
  %v1536 = vmul.f32 %v1535, %v1534
  %v1537 = vmul.f32 %v1536, %v1535
  %v1538 = vmul.f32 0.5, %v1537
  %v1539 = vsub.f32 1.5, %v1538
  %v1540 = vmul.f32 %v1535, %v1539
  %vm1541 = vweird.f32 %v1534
  %vm1542 = vweird.f32 %v1535
  %vm1543 = vmor %vm1541, %vm1542
  %v1544 = vsel %vm1543, %v1535, %v1540
  %v1546 = vrot.slane %v1544, 1
  %s1547 = vtos %v1546
  %v1548 = vstv %s1547
  %v1550 = vmul.f32 %v1531, %v1548
  %v1551 = vmul.f32 %v1532, %v1548
  %v1552 = vmul.f32 %v1533, %v1548
  %1554 = vset.pattern.permute.xlu0 0
  %1555 = vperm.xlu0 %1554, %v1454
  %v1556 = vpop.permute.xlu0 %1555
  %v1558 = vmul.f32 %v1550, %v1556
  %v1559 = vmul.f32 %v1551, %v1556
  %v1560 = vmul.f32 %v1552, %v1556
  %1562 = vset.pattern.permute.xlu0 0
  %1563 = vperm.xlu0 %1562, %v1455
  %v1564 = vpop.permute.xlu0 %1563
  %v1566 = vadd.f32 %v1558, %v1564
  %v1567 = vadd.f32 %v1559, %v1564
  %v1568 = vadd.f32 %v1560, %v1564
  %1569 = vst [vmem:[%s9] sm:$0xff] %v1566
  %1570 = vst [vmem:[%s9 + $0x8] sm:$0xff] %v1567
  %1571 = vst [vmem:[%s9 + $0x10] sm:$0xff] %v1568
  %v1572 = vld [vmem:[%s4 + $0x3] sm:$0x7]
  %v1574 = vperm.slane %v1572, 0
  %v1575 = vperm.slane %v1572, 1
  %v1576 = vperm.slane %v1572, 2
  %v1580 = vmul.f32 %v1425, %v1574
  %v1581 = vmul.f32 %v1438, %v1575
  %v1582 = vmul.f32 %v1451, %v1576
  %v1583 = vrot.slane %v1580, 4
  %v1584 = vadd.f32 %v1580, %v1583
  %v1585 = vrot.slane %v1584, 2
  %v1586 = vadd.f32 %v1584, %v1585
  %v1587 = vrot.slane %v1586, 1
  %v1588 = vadd.f32 %v1586, %v1587
  %v1589 = vrot.slane %v1581, 4
  %v1590 = vadd.f32 %v1581, %v1589
  %v1591 = vrot.slane %v1590, 2
  %v1592 = vadd.f32 %v1590, %v1591
  %v1593 = vrot.slane %v1592, 1
  %v1594 = vadd.f32 %v1592, %v1593
  %v1595 = vrot.slane %v1582, 4
  %v1596 = vadd.f32 %v1582, %v1595
  %v1597 = vrot.slane %v1596, 2
  %v1598 = vadd.f32 %v1596, %v1597
  %v1599 = vrot.slane %v1598, 1
  %v1600 = vadd.f32 %v1598, %v1599
  %v1601 = vmul.f32 %v1580, %v1425
  %v1602 = vmul.f32 %v1581, %v1438
  %v1603 = vmul.f32 %v1582, %v1451
  %v1604 = vrot.slane %v1601, 4
  %v1605 = vadd.f32 %v1601, %v1604
  %v1606 = vrot.slane %v1605, 2
  %v1607 = vadd.f32 %v1605, %v1606
  %v1608 = vrot.slane %v1607, 1
  %v1609 = vadd.f32 %v1607, %v1608
  %v1610 = vrot.slane %v1602, 4
  %v1611 = vadd.f32 %v1602, %v1610
  %v1612 = vrot.slane %v1611, 2
  %v1613 = vadd.f32 %v1611, %v1612
  %v1614 = vrot.slane %v1613, 1
  %v1615 = vadd.f32 %v1613, %v1614
  %v1616 = vrot.slane %v1603, 4
  %v1617 = vadd.f32 %v1603, %v1616
  %v1618 = vrot.slane %v1617, 2
  %v1619 = vadd.f32 %v1617, %v1618
  %v1620 = vrot.slane %v1619, 1
  %v1621 = vadd.f32 %v1619, %v1620
  %v1622 = vsel %vm610, %v1588, %v1609
  %v1623 = vsel %vm610, %v1594, %v1615
  %v1624 = vsel %vm610, %v1600, %v1621
  %v1625 = vsel %vm364, %v1622, 0.0
  %v1626 = vsel %vm364, %v1623, 0.0
  %v1627 = vadd.f32 %v1625, %v1626
  %v1628 = vsel %vm364, %v1624, 0.0
  %v1629 = vadd.f32 %v1627, %v1628
  %1630 = vadd.xlane.f32.xlu0 %v1629
  %v1631 = vpop.xlane.xlu0 %1630
  %v1632 = vmul.f32 %v1631, %v1522
  %v1633 = vmul.f32 %v1632, %v1632
  %v1635 = vrot.slane %v1633, 7
  %v1637 = vsub.f32 %v1632, %v1635
  %v1638 = vmax.f32 %v1637, 0.0
  %v1639 = vperm.slane %v1632, 0
  %v1640 = vsub.f32 %v1425, %v1639
  %v1641 = vsub.f32 %v1438, %v1639
  %v1642 = vsub.f32 %v1451, %v1639
  %v1643 = vadd.f32 %v1638, 1e-05
  %v1644 = vrsqrt.pop %v1643
  %v1645 = vmul.f32 %v1644, %v1643
  %v1646 = vmul.f32 %v1645, %v1644
  %v1647 = vmul.f32 0.5, %v1646
  %v1648 = vsub.f32 1.5, %v1647
  %v1649 = vmul.f32 %v1644, %v1648
  %vm1650 = vweird.f32 %v1643
  %vm1651 = vweird.f32 %v1644
  %vm1652 = vmor %vm1650, %vm1651
  %v1653 = vsel %vm1652, %v1644, %v1649
  %v1655 = vrot.slane %v1653, 1
  %s1656 = vtos %v1655
  %v1657 = vstv %s1656
  %v1659 = vmul.f32 %v1640, %v1657
  %v1660 = vmul.f32 %v1641, %v1657
  %v1661 = vmul.f32 %v1642, %v1657
  %v1662 = vmul.f32 %v1659, %v1556
  %v1663 = vmul.f32 %v1660, %v1556
  %v1664 = vmul.f32 %v1661, %v1556
  %v1665 = vadd.f32 %v1662, %v1564
  %v1666 = vadd.f32 %v1663, %v1564
  %v1667 = vadd.f32 %v1664, %v1564
  %1668 = vst [vmem:[%s9 + $0x18] sm:$0xff] %v1665
  %1669 = vst [vmem:[%s9 + $0x20] sm:$0xff] %v1666
  %1670 = vst [vmem:[%s9 + $0x28] sm:$0xff] %v1667
  // Predicated region
  $region38: #{down_block_forward.1} parent=0 // pred_check
    _
  $region39: #{down_block_forward.1} parent=0 // pred_check_branch
    %1672 = sbr.rel (0) target = $region41
  $region40: #{down_block_forward.1} parent=0 // pred_region
    _
  $region41: #{down_block_forward.1} parent=0 // pred_fallthru
    _
  // Predicated region
  $region42: #{down_block_forward.1} parent=0 // pred_check
    _
  $region43: #{down_block_forward.1} parent=0 // pred_check_branch
    %1674 = sbr.rel (0) target = $region45
  $region44: #{down_block_forward.1} parent=0 // pred_region
    _
  $region45: #{down_block_forward.1} parent=0 // pred_fallthru
    _

</llo_original>
